<compile_context>
chip_gen: v7x
topology: tpu7x:2x2x1
jax: 0.10.0
libtpu: 0.0.40
codegen_flags: <defaults>
</compile_context>

<pallas_src>
import functools

import jax
import jax.numpy as jnp
from jax.experimental import pallas as pl
from jax.experimental.pallas import tpu as pltpu

_LANE = 128


def _round_up(x: int, m: int) -> int:
    return pl.cdiv(x, m) * m


def _log_cholesky_cov_kernel(ld_ref, off_ref, out_ref, *, rank: int):
    """SoA (batch-in-lanes) LogCholeskyCov forward for one lane-block of batches.

    ld_ref  : (R_pad,    TB)  row r holds log_diag[r] across TB batch items.
    off_ref : (NTRI_pad, TB)  row r*(r-1)//2 + c holds strict-lower L[r, c].
    out_ref : (RR_pad,   TB)  row i*rank + j receives cov[i, j].
    TB is a multiple of 128 -> every vld/vst here is lane-dense and unmasked.
    """
    def tri(r):  # packed row-major strict-lower offset of row r
        return r * (r - 1) // 2

    # One EUP pass over the whole diag block; d[i] is a (TB,) lane vector.
    d = jnp.exp(ld_ref[...])

    # Lower triangle (incl. diagonal) only; upper mirrored from symmetry.
    for i in range(rank):
        # Non-zero entries k = 0..i of L row i (k > i are structurally zero).
        li = [off_ref[tri(i) + k, :] for k in range(i)] + [d[i]]
        for j in range(i + 1):
            lj = li if j == i else (
                [off_ref[tri(j) + k, :] for k in range(j)] + [d[j]])
            # cov[i, j] = sum_{k<=j} L[i, k] * L[j, k]   (elementwise over lanes, VPU)
            acc = li[0] * lj[0]
            for k in range(1, j + 1):
                acc = acc + li[k] * lj[k]
            out_ref[i * rank + j, :] = acc
            if i != j:
                out_ref[j * rank + i, :] = acc


def log_cholesky_cov_batched(log_diag: jax.Array, off_diag: jax.Array,
                             *, block_b: int = 1024) -> jax.Array:
    """Batched LogCholeskyCov.forward(): (B, R) & (B, R*(R-1)/2) -> (B, R, R)."""
    B, rank = log_diag.shape
    n_tri = rank * (rank - 1) // 2
    assert off_diag.shape == (B, n_tri)

    # Lane-axis batch padding / tiling.
    bp = _round_up(B, _LANE)
    tb = max(_LANE, (min(block_b, bp) // _LANE) * _LANE)
    # Prefer >= 2 balanced grid steps when the batch permits: v7x shards the
    # "parallel" axis across its 2 TensorCores; on 1-TC parts the extra step
    # costs only ~0.35 us.
    if tb >= bp and bp >= 2 * _LANE:
        tb = max(_LANE, (bp // 2 // _LANE) * _LANE)
    bp = _round_up(bp, tb)

    # Sublane-axis row padding (multiples of 8).
    r_pad = _round_up(rank, 8)
    ntri_pad = _round_up(max(n_tri, 1), 8)
    rr_pad = _round_up(rank * rank, 8)

    # SoA layout: batch on the last (lane) axis; simple transpose + pad only —
    # no scatter, no (B, R, R) expansion staged through HBM.
    ld_t = jnp.pad(log_diag.astype(jnp.float32).T,
                   ((0, r_pad - rank), (0, bp - B)))
    off_t = jnp.pad(off_diag.astype(jnp.float32).T,
                    ((0, ntri_pad - n_tri), (0, bp - B)))

    out = pl.pallas_call(
        functools.partial(_log_cholesky_cov_kernel, rank=rank),
        out_shape=jax.ShapeDtypeStruct((rr_pad, bp), jnp.float32),
        grid=(bp // tb,),
        in_specs=[
            pl.BlockSpec((r_pad, tb), lambda b: (0, b)),
            pl.BlockSpec((ntri_pad, tb), lambda b: (0, b)),
        ],
        out_specs=pl.BlockSpec((rr_pad, tb), lambda b: (0, b)),
        compiler_params=pltpu.CompilerParams(
            dimension_semantics=("parallel",)),
    )(ld_t, off_t)

    # (rr_pad, Bp) -> (B, rank, rank); padded rows/lanes are discarded.
    return out[:rank * rank, :B].T.reshape(B, rank, rank)


def log_cholesky_cov(log_diag: jax.Array, off_diag: jax.Array) -> jax.Array:
    """Single-matrix forward(), matching the PyTorch module exactly."""
    return log_cholesky_cov_batched(log_diag[None, :], off_diag[None, :])[0]


def _reference(log_diag, off_diag):
    rank = log_diag.shape[0]
    tr, tc = jnp.tril_indices(rank, k=-1)       # row-major, same as torch.tril_indices
    L = jnp.zeros((rank, rank), jnp.float32).at[tr, tc].set(off_diag)
    L = L + jnp.diag(jnp.exp(log_diag))
    return L @ L.T


if __name__ == "__main__":
    rank = 8                                    # consistent with module __init__(rank)
    num_upper_tri = rank * (rank - 1) // 2
    batch = 16                                  # "many small covariances" case

    key = jax.random.PRNGKey(0)
    k1, k2 = jax.random.split(key)
    # Deterministic synthetic parameters (PyTorch init: 0.1 * randn), batched.
    cholesky_log_diag = 0.1 * jax.random.normal(k1, (batch, rank), dtype=jnp.float32)
    cholesky_off_diag = 0.1 * jax.random.normal(k2, (batch, num_upper_tri),
                                                dtype=jnp.float32)

    # Batched kernel (single lane-dense grid step for this batch size).
    cov_b = jax.block_until_ready(
        log_cholesky_cov_batched(cholesky_log_diag, cholesky_off_diag))

    ref_b = jax.vmap(_reference)(cholesky_log_diag, cholesky_off_diag)
    assert cov_b.shape == (batch, rank, rank) and cov_b.dtype == jnp.float32
    assert jnp.allclose(cov_b, ref_b, atol=1e-5), "batched mismatch vs JAX reference"
    assert jnp.allclose(cov_b, jnp.swapaxes(cov_b, -1, -2), atol=1e-6)  # symmetry

    # Single-matrix path (exact module semantics).
    cov0 = jax.block_until_ready(
        log_cholesky_cov(cholesky_log_diag[0], cholesky_off_diag[0]))
    assert cov0.shape == (rank, rank)
    assert jnp.allclose(cov0, ref_b[0], atol=1e-5), "single mismatch vs JAX reference"

    print("KERNEL_OK")
</pallas_src>

<mosaic_0001>
module attributes {stable_mosaic.version = 11 : i64} {
  func.func @_log_cholesky_cov_kernel(%arg0: i32, %arg1: memref<8x128xf32, #tpu.memory_space<vmem>>, %arg2: memref<32x128xf32, #tpu.memory_space<vmem>>, %arg3: memref<64x128xf32, #tpu.memory_space<vmem>>) attributes {dimension_semantics = [#tpu.dimension_semantics<parallel>], iteration_bounds = array<i64: 1>, scalar_prefetch = 0 : i64, scratch_operands = 0 : i64, tpu.core_type = #tpu.core_type<tc>, window_params = [{transform_indices = @transform_0, window_bounds = array<i64: 8, 128>}, {transform_indices = @transform_1, window_bounds = array<i64: 32, 128>}, {transform_indices = @transform_2, window_bounds = array<i64: 64, 128>}]} {
    %c0 = arith.constant 0 : index
    %c0_0 = arith.constant 0 : index
    %0 = vector.load %arg1[%c0, %c0_0] : memref<8x128xf32, #tpu.memory_space<vmem>>, vector<8x128xf32>
    %1 = math.exp %0 : vector<8x128xf32>
    %2 = vector.extract_strided_slice %1 {offsets = [0, 0], sizes = [1, 128], strides = [1, 1]} : vector<8x128xf32> to vector<1x128xf32>
    %3 = vector.shape_cast %2 : vector<1x128xf32> to vector<128xf32>
    %4 = arith.mulf %3, %3 : vector<128xf32>
    %c0_1 = arith.constant 0 : index
    %c0_2 = arith.constant 0 : index
    %5 = vector.load %arg3[%c0_1, %c0_2] : memref<64x128xf32, #tpu.memory_space<vmem>>, vector<1x128xf32>
    %6 = vector.shape_cast %5 : vector<1x128xf32> to vector<128xf32>
    %7 = vector.shape_cast %4 : vector<128xf32> to vector<1x128xf32>
    tpu.vector_store %arg3[%c0_1, %c0_2], %7 {strides = array<i32>} : memref<64x128xf32, #tpu.memory_space<vmem>>, vector<1x128xf32>,
    %c0_3 = arith.constant 0 : index
    %c0_4 = arith.constant 0 : index
    %8 = vector.load %arg2[%c0_3, %c0_4] : memref<32x128xf32, #tpu.memory_space<vmem>>, vector<1x128xf32>
    %9 = vector.shape_cast %8 : vector<1x128xf32> to vector<128xf32>
    %10 = vector.extract_strided_slice %1 {offsets = [1, 0], sizes = [1, 128], strides = [1, 1]} : vector<8x128xf32> to vector<1x128xf32>
    %11 = vector.shape_cast %10 : vector<1x128xf32> to vector<128xf32>
    %12 = vector.extract_strided_slice %1 {offsets = [0, 0], sizes = [1, 128], strides = [1, 1]} : vector<8x128xf32> to vector<1x128xf32>
    %13 = vector.shape_cast %12 : vector<1x128xf32> to vector<128xf32>
    %14 = arith.mulf %9, %13 : vector<128xf32>
    %c8 = arith.constant 8 : index
    %c0_5 = arith.constant 0 : index
    %15 = vector.load %arg3[%c8, %c0_5] : memref<64x128xf32, #tpu.memory_space<vmem>>, vector<1x128xf32>
    %16 = vector.shape_cast %15 : vector<1x128xf32> to vector<128xf32>
    %17 = vector.shape_cast %14 : vector<128xf32> to vector<1x128xf32>
    tpu.vector_store %arg3[%c8, %c0_5], %17 {strides = array<i32>} : memref<64x128xf32, #tpu.memory_space<vmem>>, vector<1x128xf32>,
    %c1 = arith.constant 1 : index
    %c0_6 = arith.constant 0 : index
    %18 = vector.load %arg3[%c1, %c0_6] : memref<64x128xf32, #tpu.memory_space<vmem>>, vector<1x128xf32>
    %19 = vector.shape_cast %18 : vector<1x128xf32> to vector<128xf32>
    %20 = vector.shape_cast %14 : vector<128xf32> to vector<1x128xf32>
    tpu.vector_store %arg3[%c1, %c0_6], %20 {strides = array<i32>} : memref<64x128xf32, #tpu.memory_space<vmem>>, vector<1x128xf32>,
    %21 = arith.mulf %9, %9 : vector<128xf32>
    %22 = arith.mulf %11, %11 : vector<128xf32>
    %23 = arith.addf %21, %22 : vector<128xf32>
    %c9 = arith.constant 9 : index
    %c0_7 = arith.constant 0 : index
    %24 = vector.load %arg3[%c9, %c0_7] : memref<64x128xf32, #tpu.memory_space<vmem>>, vector<1x128xf32>
    %25 = vector.shape_cast %24 : vector<1x128xf32> to vector<128xf32>
    %26 = vector.shape_cast %23 : vector<128xf32> to vector<1x128xf32>
    tpu.vector_store %arg3[%c9, %c0_7], %26 {strides = array<i32>} : memref<64x128xf32, #tpu.memory_space<vmem>>, vector<1x128xf32>,
    %c1_8 = arith.constant 1 : index
    %c0_9 = arith.constant 0 : index
    %27 = vector.load %arg2[%c1_8, %c0_9] : memref<32x128xf32, #tpu.memory_space<vmem>>, vector<1x128xf32>
    %28 = vector.shape_cast %27 : vector<1x128xf32> to vector<128xf32>
    %c2 = arith.constant 2 : index
    %c0_10 = arith.constant 0 : index
    %29 = vector.load %arg2[%c2, %c0_10] : memref<32x128xf32, #tpu.memory_space<vmem>>, vector<1x128xf32>
    %30 = vector.shape_cast %29 : vector<1x128xf32> to vector<128xf32>
    %31 = vector.extract_strided_slice %1 {offsets = [2, 0], sizes = [1, 128], strides = [1, 1]} : vector<8x128xf32> to vector<1x128xf32>
    %32 = vector.shape_cast %31 : vector<1x128xf32> to vector<128xf32>
    %33 = vector.extract_strided_slice %1 {offsets = [0, 0], sizes = [1, 128], strides = [1, 1]} : vector<8x128xf32> to vector<1x128xf32>
    %34 = vector.shape_cast %33 : vector<1x128xf32> to vector<128xf32>
    %35 = arith.mulf %28, %34 : vector<128xf32>
    %c16 = arith.constant 16 : index
    %c0_11 = arith.constant 0 : index
    %36 = vector.load %arg3[%c16, %c0_11] : memref<64x128xf32, #tpu.memory_space<vmem>>, vector<1x128xf32>
    %37 = vector.shape_cast %36 : vector<1x128xf32> to vector<128xf32>
    %38 = vector.shape_cast %35 : vector<128xf32> to vector<1x128xf32>
    tpu.vector_store %arg3[%c16, %c0_11], %38 {strides = array<i32>} : memref<64x128xf32, #tpu.memory_space<vmem>>, vector<1x128xf32>,
    %c2_12 = arith.constant 2 : index
    %c0_13 = arith.constant 0 : index
    %39 = vector.load %arg3[%c2_12, %c0_13] : memref<64x128xf32, #tpu.memory_space<vmem>>, vector<1x128xf32>
    %40 = vector.shape_cast %39 : vector<1x128xf32> to vector<128xf32>
    %41 = vector.shape_cast %35 : vector<128xf32> to vector<1x128xf32>
    tpu.vector_store %arg3[%c2_12, %c0_13], %41 {strides = array<i32>} : memref<64x128xf32, #tpu.memory_space<vmem>>, vector<1x128xf32>,
    %c0_14 = arith.constant 0 : index
    %c0_15 = arith.constant 0 : index
    %42 = vector.load %arg2[%c0_14, %c0_15] : memref<32x128xf32, #tpu.memory_space<vmem>>, vector<1x128xf32>
    %43 = vector.shape_cast %42 : vector<1x128xf32> to vector<128xf32>
    %44 = vector.extract_strided_slice %1 {offsets = [1, 0], sizes = [1, 128], strides = [1, 1]} : vector<8x128xf32> to vector<1x128xf32>
    %45 = vector.shape_cast %44 : vector<1x128xf32> to vector<128xf32>
    %46 = arith.mulf %28, %43 : vector<128xf32>
    %47 = arith.mulf %30, %45 : vector<128xf32>
    %48 = arith.addf %46, %47 : vector<128xf32>
    %c17 = arith.constant 17 : index
    %c0_16 = arith.constant 0 : index
    %49 = vector.load %arg3[%c17, %c0_16] : memref<64x128xf32, #tpu.memory_space<vmem>>, vector<1x128xf32>
    %50 = vector.shape_cast %49 : vector<1x128xf32> to vector<128xf32>
    %51 = vector.shape_cast %48 : vector<128xf32> to vector<1x128xf32>
    tpu.vector_store %arg3[%c17, %c0_16], %51 {strides = array<i32>} : memref<64x128xf32, #tpu.memory_space<vmem>>, vector<1x128xf32>,
    %c10 = arith.constant 10 : index
    %c0_17 = arith.constant 0 : index
    %52 = vector.load %arg3[%c10, %c0_17] : memref<64x128xf32, #tpu.memory_space<vmem>>, vector<1x128xf32>
    %53 = vector.shape_cast %52 : vector<1x128xf32> to vector<128xf32>
    %54 = vector.shape_cast %48 : vector<128xf32> to vector<1x128xf32>
    tpu.vector_store %arg3[%c10, %c0_17], %54 {strides = array<i32>} : memref<64x128xf32, #tpu.memory_space<vmem>>, vector<1x128xf32>,
    %55 = arith.mulf %28, %28 : vector<128xf32>
    %56 = arith.mulf %30, %30 : vector<128xf32>
    %57 = arith.addf %55, %56 : vector<128xf32>
    %58 = arith.mulf %32, %32 : vector<128xf32>
    %59 = arith.addf %57, %58 : vector<128xf32>
    %c18 = arith.constant 18 : index
    %c0_18 = arith.constant 0 : index
    %60 = vector.load %arg3[%c18, %c0_18] : memref<64x128xf32, #tpu.memory_space<vmem>>, vector<1x128xf32>
    %61 = vector.shape_cast %60 : vector<1x128xf32> to vector<128xf32>
    %62 = vector.shape_cast %59 : vector<128xf32> to vector<1x128xf32>
    tpu.vector_store %arg3[%c18, %c0_18], %62 {strides = array<i32>} : memref<64x128xf32, #tpu.memory_space<vmem>>, vector<1x128xf32>,
    %c3 = arith.constant 3 : index
    %c0_19 = arith.constant 0 : index
    %63 = vector.load %arg2[%c3, %c0_19] : memref<32x128xf32, #tpu.memory_space<vmem>>, vector<1x128xf32>
    %64 = vector.shape_cast %63 : vector<1x128xf32> to vector<128xf32>
    %c4 = arith.constant 4 : index
    %c0_20 = arith.constant 0 : index
    %65 = vector.load %arg2[%c4, %c0_20] : memref<32x128xf32, #tpu.memory_space<vmem>>, vector<1x128xf32>
    %66 = vector.shape_cast %65 : vector<1x128xf32> to vector<128xf32>
    %c5 = arith.constant 5 : index
    %c0_21 = arith.constant 0 : index
    %67 = vector.load %arg2[%c5, %c0_21] : memref<32x128xf32, #tpu.memory_space<vmem>>, vector<1x128xf32>
    %68 = vector.shape_cast %67 : vector<1x128xf32> to vector<128xf32>
    %69 = vector.extract_strided_slice %1 {offsets = [3, 0], sizes = [1, 128], strides = [1, 1]} : vector<8x128xf32> to vector<1x128xf32>
    %70 = vector.shape_cast %69 : vector<1x128xf32> to vector<128xf32>
    %71 = vector.extract_strided_slice %1 {offsets = [0, 0], sizes = [1, 128], strides = [1, 1]} : vector<8x128xf32> to vector<1x128xf32>
    %72 = vector.shape_cast %71 : vector<1x128xf32> to vector<128xf32>
    %73 = arith.mulf %64, %72 : vector<128xf32>
    %c24 = arith.constant 24 : index
    %c0_22 = arith.constant 0 : index
    %74 = vector.load %arg3[%c24, %c0_22] : memref<64x128xf32, #tpu.memory_space<vmem>>, vector<1x128xf32>
    %75 = vector.shape_cast %74 : vector<1x128xf32> to vector<128xf32>
    %76 = vector.shape_cast %73 : vector<128xf32> to vector<1x128xf32>
    tpu.vector_store %arg3[%c24, %c0_22], %76 {strides = array<i32>} : memref<64x128xf32, #tpu.memory_space<vmem>>, vector<1x128xf32>,
    %c3_23 = arith.constant 3 : index
    %c0_24 = arith.constant 0 : index
    %77 = vector.load %arg3[%c3_23, %c0_24] : memref<64x128xf32, #tpu.memory_space<vmem>>, vector<1x128xf32>
    %78 = vector.shape_cast %77 : vector<1x128xf32> to vector<128xf32>
    %79 = vector.shape_cast %73 : vector<128xf32> to vector<1x128xf32>
    tpu.vector_store %arg3[%c3_23, %c0_24], %79 {strides = array<i32>} : memref<64x128xf32, #tpu.memory_space<vmem>>, vector<1x128xf32>,
    %c0_25 = arith.constant 0 : index
    %c0_26 = arith.constant 0 : index
    %80 = vector.load %arg2[%c0_25, %c0_26] : memref<32x128xf32, #tpu.memory_space<vmem>>, vector<1x128xf32>
    %81 = vector.shape_cast %80 : vector<1x128xf32> to vector<128xf32>
    %82 = vector.extract_strided_slice %1 {offsets = [1, 0], sizes = [1, 128], strides = [1, 1]} : vector<8x128xf32> to vector<1x128xf32>
    %83 = vector.shape_cast %82 : vector<1x128xf32> to vector<128xf32>
    %84 = arith.mulf %64, %81 : vector<128xf32>
    %85 = arith.mulf %66, %83 : vector<128xf32>
    %86 = arith.addf %84, %85 : vector<128xf32>
    %c25 = arith.constant 25 : index
    %c0_27 = arith.constant 0 : index
    %87 = vector.load %arg3[%c25, %c0_27] : memref<64x128xf32, #tpu.memory_space<vmem>>, vector<1x128xf32>
    %88 = vector.shape_cast %87 : vector<1x128xf32> to vector<128xf32>
    %89 = vector.shape_cast %86 : vector<128xf32> to vector<1x128xf32>
    tpu.vector_store %arg3[%c25, %c0_27], %89 {strides = array<i32>} : memref<64x128xf32, #tpu.memory_space<vmem>>, vector<1x128xf32>,
    %c11 = arith.constant 11 : index
    %c0_28 = arith.constant 0 : index
    %90 = vector.load %arg3[%c11, %c0_28] : memref<64x128xf32, #tpu.memory_space<vmem>>, vector<1x128xf32>
    %91 = vector.shape_cast %90 : vector<1x128xf32> to vector<128xf32>
    %92 = vector.shape_cast %86 : vector<128xf32> to vector<1x128xf32>
    tpu.vector_store %arg3[%c11, %c0_28], %92 {strides = array<i32>} : memref<64x128xf32, #tpu.memory_space<vmem>>, vector<1x128xf32>,
    %c1_29 = arith.constant 1 : index
    %c0_30 = arith.constant 0 : index
    %93 = vector.load %arg2[%c1_29, %c0_30] : memref<32x128xf32, #tpu.memory_space<vmem>>, vector<1x128xf32>
    %94 = vector.shape_cast %93 : vector<1x128xf32> to vector<128xf32>
    %c2_31 = arith.constant 2 : index
    %c0_32 = arith.constant 0 : index
    %95 = vector.load %arg2[%c2_31, %c0_32] : memref<32x128xf32, #tpu.memory_space<vmem>>, vector<1x128xf32>
    %96 = vector.shape_cast %95 : vector<1x128xf32> to vector<128xf32>
    %97 = vector.extract_strided_slice %1 {offsets = [2, 0], sizes = [1, 128], strides = [1, 1]} : vector<8x128xf32> to vector<1x128xf32>
    %98 = vector.shape_cast %97 : vector<1x128xf32> to vector<128xf32>
    %99 = arith.mulf %64, %94 : vector<128xf32>
    %100 = arith.mulf %66, %96 : vector<128xf32>
    %101 = arith.addf %99, %100 : vector<128xf32>
    %102 = arith.mulf %68, %98 : vector<128xf32>
    %103 = arith.addf %101, %102 : vector<128xf32>
    %c26 = arith.constant 26 : index
    %c0_33 = arith.constant 0 : index
    %104 = vector.load %arg3[%c26, %c0_33] : memref<64x128xf32, #tpu.memory_space<vmem>>, vector<1x128xf32>
    %105 = vector.shape_cast %104 : vector<1x128xf32> to vector<128xf32>
    %106 = vector.shape_cast %103 : vector<128xf32> to vector<1x128xf32>
    tpu.vector_store %arg3[%c26, %c0_33], %106 {strides = array<i32>} : memref<64x128xf32, #tpu.memory_space<vmem>>, vector<1x128xf32>,
    %c19 = arith.constant 19 : index
    %c0_34 = arith.constant 0 : index
    %107 = vector.load %arg3[%c19, %c0_34] : memref<64x128xf32, #tpu.memory_space<vmem>>, vector<1x128xf32>
    %108 = vector.shape_cast %107 : vector<1x128xf32> to vector<128xf32>
    %109 = vector.shape_cast %103 : vector<128xf32> to vector<1x128xf32>
    tpu.vector_store %arg3[%c19, %c0_34], %109 {strides = array<i32>} : memref<64x128xf32, #tpu.memory_space<vmem>>, vector<1x128xf32>,
    %110 = arith.mulf %64, %64 : vector<128xf32>
    %111 = arith.mulf %66, %66 : vector<128xf32>
    %112 = arith.addf %110, %111 : vector<128xf32>
    %113 = arith.mulf %68, %68 : vector<128xf32>
    %114 = arith.addf %112, %113 : vector<128xf32>
    %115 = arith.mulf %70, %70 : vector<128xf32>
    %116 = arith.addf %114, %115 : vector<128xf32>
    %c27 = arith.constant 27 : index
    %c0_35 = arith.constant 0 : index
    %117 = vector.load %arg3[%c27, %c0_35] : memref<64x128xf32, #tpu.memory_space<vmem>>, vector<1x128xf32>
    %118 = vector.shape_cast %117 : vector<1x128xf32> to vector<128xf32>
    %119 = vector.shape_cast %116 : vector<128xf32> to vector<1x128xf32>
    tpu.vector_store %arg3[%c27, %c0_35], %119 {strides = array<i32>} : memref<64x128xf32, #tpu.memory_space<vmem>>, vector<1x128xf32>,
    %c6 = arith.constant 6 : index
    %c0_36 = arith.constant 0 : index
    %120 = vector.load %arg2[%c6, %c0_36] : memref<32x128xf32, #tpu.memory_space<vmem>>, vector<1x128xf32>
    %121 = vector.shape_cast %120 : vector<1x128xf32> to vector<128xf32>
    %c7 = arith.constant 7 : index
    %c0_37 = arith.constant 0 : index
    %122 = vector.load %arg2[%c7, %c0_37] : memref<32x128xf32, #tpu.memory_space<vmem>>, vector<1x128xf32>
    %123 = vector.shape_cast %122 : vector<1x128xf32> to vector<128xf32>
    %c8_38 = arith.constant 8 : index
    %c0_39 = arith.constant 0 : index
    %124 = vector.load %arg2[%c8_38, %c0_39] : memref<32x128xf32, #tpu.memory_space<vmem>>, vector<1x128xf32>
    %125 = vector.shape_cast %124 : vector<1x128xf32> to vector<128xf32>
    %c9_40 = arith.constant 9 : index
    %c0_41 = arith.constant 0 : index
    %126 = vector.load %arg2[%c9_40, %c0_41] : memref<32x128xf32, #tpu.memory_space<vmem>>, vector<1x128xf32>
    %127 = vector.shape_cast %126 : vector<1x128xf32> to vector<128xf32>
    %128 = vector.extract_strided_slice %1 {offsets = [4, 0], sizes = [1, 128], strides = [1, 1]} : vector<8x128xf32> to vector<1x128xf32>
    %129 = vector.shape_cast %128 : vector<1x128xf32> to vector<128xf32>
    %130 = vector.extract_strided_slice %1 {offsets = [0, 0], sizes = [1, 128], strides = [1, 1]} : vector<8x128xf32> to vector<1x128xf32>
    %131 = vector.shape_cast %130 : vector<1x128xf32> to vector<128xf32>
    %132 = arith.mulf %121, %131 : vector<128xf32>
    %c32 = arith.constant 32 : index
    %c0_42 = arith.constant 0 : index
    %133 = vector.load %arg3[%c32, %c0_42] : memref<64x128xf32, #tpu.memory_space<vmem>>, vector<1x128xf32>
    %134 = vector.shape_cast %133 : vector<1x128xf32> to vector<128xf32>
    %135 = vector.shape_cast %132 : vector<128xf32> to vector<1x128xf32>
    tpu.vector_store %arg3[%c32, %c0_42], %135 {strides = array<i32>} : memref<64x128xf32, #tpu.memory_space<vmem>>, vector<1x128xf32>,
    %c4_43 = arith.constant 4 : index
    %c0_44 = arith.constant 0 : index
    %136 = vector.load %arg3[%c4_43, %c0_44] : memref<64x128xf32, #tpu.memory_space<vmem>>, vector<1x128xf32>
    %137 = vector.shape_cast %136 : vector<1x128xf32> to vector<128xf32>
    %138 = vector.shape_cast %132 : vector<128xf32> to vector<1x128xf32>
    tpu.vector_store %arg3[%c4_43, %c0_44], %138 {strides = array<i32>} : memref<64x128xf32, #tpu.memory_space<vmem>>, vector<1x128xf32>,
    %c0_45 = arith.constant 0 : index
    %c0_46 = arith.constant 0 : index
    %139 = vector.load %arg2[%c0_45, %c0_46] : memref<32x128xf32, #tpu.memory_space<vmem>>, vector<1x128xf32>
    %140 = vector.shape_cast %139 : vector<1x128xf32> to vector<128xf32>
    %141 = vector.extract_strided_slice %1 {offsets = [1, 0], sizes = [1, 128], strides = [1, 1]} : vector<8x128xf32> to vector<1x128xf32>
    %142 = vector.shape_cast %141 : vector<1x128xf32> to vector<128xf32>
    %143 = arith.mulf %121, %140 : vector<128xf32>
    %144 = arith.mulf %123, %142 : vector<128xf32>
    %145 = arith.addf %143, %144 : vector<128xf32>
    %c33 = arith.constant 33 : index
    %c0_47 = arith.constant 0 : index
    %146 = vector.load %arg3[%c33, %c0_47] : memref<64x128xf32, #tpu.memory_space<vmem>>, vector<1x128xf32>
    %147 = vector.shape_cast %146 : vector<1x128xf32> to vector<128xf32>
    %148 = vector.shape_cast %145 : vector<128xf32> to vector<1x128xf32>
    tpu.vector_store %arg3[%c33, %c0_47], %148 {strides = array<i32>} : memref<64x128xf32, #tpu.memory_space<vmem>>, vector<1x128xf32>,
    %c12 = arith.constant 12 : index
    %c0_48 = arith.constant 0 : index
    %149 = vector.load %arg3[%c12, %c0_48] : memref<64x128xf32, #tpu.memory_space<vmem>>, vector<1x128xf32>
    %150 = vector.shape_cast %149 : vector<1x128xf32> to vector<128xf32>
    %151 = vector.shape_cast %145 : vector<128xf32> to vector<1x128xf32>
    tpu.vector_store %arg3[%c12, %c0_48], %151 {strides = array<i32>} : memref<64x128xf32, #tpu.memory_space<vmem>>, vector<1x128xf32>,
    %c1_49 = arith.constant 1 : index
    %c0_50 = arith.constant 0 : index
    %152 = vector.load %arg2[%c1_49, %c0_50] : memref<32x128xf32, #tpu.memory_space<vmem>>, vector<1x128xf32>
    %153 = vector.shape_cast %152 : vector<1x128xf32> to vector<128xf32>
    %c2_51 = arith.constant 2 : index
    %c0_52 = arith.constant 0 : index
    %154 = vector.load %arg2[%c2_51, %c0_52] : memref<32x128xf32, #tpu.memory_space<vmem>>, vector<1x128xf32>
    %155 = vector.shape_cast %154 : vector<1x128xf32> to vector<128xf32>
    %156 = vector.extract_strided_slice %1 {offsets = [2, 0], sizes = [1, 128], strides = [1, 1]} : vector<8x128xf32> to vector<1x128xf32>
    %157 = vector.shape_cast %156 : vector<1x128xf32> to vector<128xf32>
    %158 = arith.mulf %121, %153 : vector<128xf32>
    %159 = arith.mulf %123, %155 : vector<128xf32>
    %160 = arith.addf %158, %159 : vector<128xf32>
    %161 = arith.mulf %125, %157 : vector<128xf32>
    %162 = arith.addf %160, %161 : vector<128xf32>
    %c34 = arith.constant 34 : index
    %c0_53 = arith.constant 0 : index
    %163 = vector.load %arg3[%c34, %c0_53] : memref<64x128xf32, #tpu.memory_space<vmem>>, vector<1x128xf32>
    %164 = vector.shape_cast %163 : vector<1x128xf32> to vector<128xf32>
    %165 = vector.shape_cast %162 : vector<128xf32> to vector<1x128xf32>
    tpu.vector_store %arg3[%c34, %c0_53], %165 {strides = array<i32>} : memref<64x128xf32, #tpu.memory_space<vmem>>, vector<1x128xf32>,
    %c20 = arith.constant 20 : index
    %c0_54 = arith.constant 0 : index
    %166 = vector.load %arg3[%c20, %c0_54] : memref<64x128xf32, #tpu.memory_space<vmem>>, vector<1x128xf32>
    %167 = vector.shape_cast %166 : vector<1x128xf32> to vector<128xf32>
    %168 = vector.shape_cast %162 : vector<128xf32> to vector<1x128xf32>
    tpu.vector_store %arg3[%c20, %c0_54], %168 {strides = array<i32>} : memref<64x128xf32, #tpu.memory_space<vmem>>, vector<1x128xf32>,
    %c3_55 = arith.constant 3 : index
    %c0_56 = arith.constant 0 : index
    %169 = vector.load %arg2[%c3_55, %c0_56] : memref<32x128xf32, #tpu.memory_space<vmem>>, vector<1x128xf32>
    %170 = vector.shape_cast %169 : vector<1x128xf32> to vector<128xf32>
    %c4_57 = arith.constant 4 : index
    %c0_58 = arith.constant 0 : index
    %171 = vector.load %arg2[%c4_57, %c0_58] : memref<32x128xf32, #tpu.memory_space<vmem>>, vector<1x128xf32>
    %172 = vector.shape_cast %171 : vector<1x128xf32> to vector<128xf32>
    %c5_59 = arith.constant 5 : index
    %c0_60 = arith.constant 0 : index
    %173 = vector.load %arg2[%c5_59, %c0_60] : memref<32x128xf32, #tpu.memory_space<vmem>>, vector<1x128xf32>
    %174 = vector.shape_cast %173 : vector<1x128xf32> to vector<128xf32>
    %175 = vector.extract_strided_slice %1 {offsets = [3, 0], sizes = [1, 128], strides = [1, 1]} : vector<8x128xf32> to vector<1x128xf32>
    %176 = vector.shape_cast %175 : vector<1x128xf32> to vector<128xf32>
    %177 = arith.mulf %121, %170 : vector<128xf32>
    %178 = arith.mulf %123, %172 : vector<128xf32>
    %179 = arith.addf %177, %178 : vector<128xf32>
    %180 = arith.mulf %125, %174 : vector<128xf32>
    %181 = arith.addf %179, %180 : vector<128xf32>
    %182 = arith.mulf %127, %176 : vector<128xf32>
    %183 = arith.addf %181, %182 : vector<128xf32>
    %c35 = arith.constant 35 : index
    %c0_61 = arith.constant 0 : index
    %184 = vector.load %arg3[%c35, %c0_61] : memref<64x128xf32, #tpu.memory_space<vmem>>, vector<1x128xf32>
    %185 = vector.shape_cast %184 : vector<1x128xf32> to vector<128xf32>
    %186 = vector.shape_cast %183 : vector<128xf32> to vector<1x128xf32>
    tpu.vector_store %arg3[%c35, %c0_61], %186 {strides = array<i32>} : memref<64x128xf32, #tpu.memory_space<vmem>>, vector<1x128xf32>,
    %c28 = arith.constant 28 : index
    %c0_62 = arith.constant 0 : index
    %187 = vector.load %arg3[%c28, %c0_62] : memref<64x128xf32, #tpu.memory_space<vmem>>, vector<1x128xf32>
    %188 = vector.shape_cast %187 : vector<1x128xf32> to vector<128xf32>
    %189 = vector.shape_cast %183 : vector<128xf32> to vector<1x128xf32>
    tpu.vector_store %arg3[%c28, %c0_62], %189 {strides = array<i32>} : memref<64x128xf32, #tpu.memory_space<vmem>>, vector<1x128xf32>,
    %190 = arith.mulf %121, %121 : vector<128xf32>
    %191 = arith.mulf %123, %123 : vector<128xf32>
    %192 = arith.addf %190, %191 : vector<128xf32>
    %193 = arith.mulf %125, %125 : vector<128xf32>
    %194 = arith.addf %192, %193 : vector<128xf32>
    %195 = arith.mulf %127, %127 : vector<128xf32>
    %196 = arith.addf %194, %195 : vector<128xf32>
    %197 = arith.mulf %129, %129 : vector<128xf32>
    %198 = arith.addf %196, %197 : vector<128xf32>
    %c36 = arith.constant 36 : index
    %c0_63 = arith.constant 0 : index
    %199 = vector.load %arg3[%c36, %c0_63] : memref<64x128xf32, #tpu.memory_space<vmem>>, vector<1x128xf32>
    %200 = vector.shape_cast %199 : vector<1x128xf32> to vector<128xf32>
    %201 = vector.shape_cast %198 : vector<128xf32> to vector<1x128xf32>
    tpu.vector_store %arg3[%c36, %c0_63], %201 {strides = array<i32>} : memref<64x128xf32, #tpu.memory_space<vmem>>, vector<1x128xf32>,
    %c10_64 = arith.constant 10 : index
    %c0_65 = arith.constant 0 : index
    %202 = vector.load %arg2[%c10_64, %c0_65] : memref<32x128xf32, #tpu.memory_space<vmem>>, vector<1x128xf32>
    %203 = vector.shape_cast %202 : vector<1x128xf32> to vector<128xf32>
    %c11_66 = arith.constant 11 : index
    %c0_67 = arith.constant 0 : index
    %204 = vector.load %arg2[%c11_66, %c0_67] : memref<32x128xf32, #tpu.memory_space<vmem>>, vector<1x128xf32>
    %205 = vector.shape_cast %204 : vector<1x128xf32> to vector<128xf32>
    %c12_68 = arith.constant 12 : index
    %c0_69 = arith.constant 0 : index
    %206 = vector.load %arg2[%c12_68, %c0_69] : memref<32x128xf32, #tpu.memory_space<vmem>>, vector<1x128xf32>
    %207 = vector.shape_cast %206 : vector<1x128xf32> to vector<128xf32>
    %c13 = arith.constant 13 : index
    %c0_70 = arith.constant 0 : index
    %208 = vector.load %arg2[%c13, %c0_70] : memref<32x128xf32, #tpu.memory_space<vmem>>, vector<1x128xf32>
    %209 = vector.shape_cast %208 : vector<1x128xf32> to vector<128xf32>
    %c14 = arith.constant 14 : index
    %c0_71 = arith.constant 0 : index
    %210 = vector.load %arg2[%c14, %c0_71] : memref<32x128xf32, #tpu.memory_space<vmem>>, vector<1x128xf32>
    %211 = vector.shape_cast %210 : vector<1x128xf32> to vector<128xf32>
    %212 = vector.extract_strided_slice %1 {offsets = [5, 0], sizes = [1, 128], strides = [1, 1]} : vector<8x128xf32> to vector<1x128xf32>
    %213 = vector.shape_cast %212 : vector<1x128xf32> to vector<128xf32>
    %214 = vector.extract_strided_slice %1 {offsets = [0, 0], sizes = [1, 128], strides = [1, 1]} : vector<8x128xf32> to vector<1x128xf32>
    %215 = vector.shape_cast %214 : vector<1x128xf32> to vector<128xf32>
    %216 = arith.mulf %203, %215 : vector<128xf32>
    %c40 = arith.constant 40 : index
    %c0_72 = arith.constant 0 : index
    %217 = vector.load %arg3[%c40, %c0_72] : memref<64x128xf32, #tpu.memory_space<vmem>>, vector<1x128xf32>
    %218 = vector.shape_cast %217 : vector<1x128xf32> to vector<128xf32>
    %219 = vector.shape_cast %216 : vector<128xf32> to vector<1x128xf32>
    tpu.vector_store %arg3[%c40, %c0_72], %219 {strides = array<i32>} : memref<64x128xf32, #tpu.memory_space<vmem>>, vector<1x128xf32>,
    %c5_73 = arith.constant 5 : index
    %c0_74 = arith.constant 0 : index
    %220 = vector.load %arg3[%c5_73, %c0_74] : memref<64x128xf32, #tpu.memory_space<vmem>>, vector<1x128xf32>
    %221 = vector.shape_cast %220 : vector<1x128xf32> to vector<128xf32>
    %222 = vector.shape_cast %216 : vector<128xf32> to vector<1x128xf32>
    tpu.vector_store %arg3[%c5_73, %c0_74], %222 {strides = array<i32>} : memref<64x128xf32, #tpu.memory_space<vmem>>, vector<1x128xf32>,
    %c0_75 = arith.constant 0 : index
    %c0_76 = arith.constant 0 : index
    %223 = vector.load %arg2[%c0_75, %c0_76] : memref<32x128xf32, #tpu.memory_space<vmem>>, vector<1x128xf32>
    %224 = vector.shape_cast %223 : vector<1x128xf32> to vector<128xf32>
    %225 = vector.extract_strided_slice %1 {offsets = [1, 0], sizes = [1, 128], strides = [1, 1]} : vector<8x128xf32> to vector<1x128xf32>
    %226 = vector.shape_cast %225 : vector<1x128xf32> to vector<128xf32>
    %227 = arith.mulf %203, %224 : vector<128xf32>
    %228 = arith.mulf %205, %226 : vector<128xf32>
    %229 = arith.addf %227, %228 : vector<128xf32>
    %c41 = arith.constant 41 : index
    %c0_77 = arith.constant 0 : index
    %230 = vector.load %arg3[%c41, %c0_77] : memref<64x128xf32, #tpu.memory_space<vmem>>, vector<1x128xf32>
    %231 = vector.shape_cast %230 : vector<1x128xf32> to vector<128xf32>
    %232 = vector.shape_cast %229 : vector<128xf32> to vector<1x128xf32>
    tpu.vector_store %arg3[%c41, %c0_77], %232 {strides = array<i32>} : memref<64x128xf32, #tpu.memory_space<vmem>>, vector<1x128xf32>,
    %c13_78 = arith.constant 13 : index
    %c0_79 = arith.constant 0 : index
    %233 = vector.load %arg3[%c13_78, %c0_79] : memref<64x128xf32, #tpu.memory_space<vmem>>, vector<1x128xf32>
    %234 = vector.shape_cast %233 : vector<1x128xf32> to vector<128xf32>
    %235 = vector.shape_cast %229 : vector<128xf32> to vector<1x128xf32>
    tpu.vector_store %arg3[%c13_78, %c0_79], %235 {strides = array<i32>} : memref<64x128xf32, #tpu.memory_space<vmem>>, vector<1x128xf32>,
    %c1_80 = arith.constant 1 : index
    %c0_81 = arith.constant 0 : index
    %236 = vector.load %arg2[%c1_80, %c0_81] : memref<32x128xf32, #tpu.memory_space<vmem>>, vector<1x128xf32>
    %237 = vector.shape_cast %236 : vector<1x128xf32> to vector<128xf32>
    %c2_82 = arith.constant 2 : index
    %c0_83 = arith.constant 0 : index
    %238 = vector.load %arg2[%c2_82, %c0_83] : memref<32x128xf32, #tpu.memory_space<vmem>>, vector<1x128xf32>
    %239 = vector.shape_cast %238 : vector<1x128xf32> to vector<128xf32>
    %240 = vector.extract_strided_slice %1 {offsets = [2, 0], sizes = [1, 128], strides = [1, 1]} : vector<8x128xf32> to vector<1x128xf32>
    %241 = vector.shape_cast %240 : vector<1x128xf32> to vector<128xf32>
    %242 = arith.mulf %203, %237 : vector<128xf32>
    %243 = arith.mulf %205, %239 : vector<128xf32>
    %244 = arith.addf %242, %243 : vector<128xf32>
    %245 = arith.mulf %207, %241 : vector<128xf32>
    %246 = arith.addf %244, %245 : vector<128xf32>
    %c42 = arith.constant 42 : index
    %c0_84 = arith.constant 0 : index
    %247 = vector.load %arg3[%c42, %c0_84] : memref<64x128xf32, #tpu.memory_space<vmem>>, vector<1x128xf32>
    %248 = vector.shape_cast %247 : vector<1x128xf32> to vector<128xf32>
    %249 = vector.shape_cast %246 : vector<128xf32> to vector<1x128xf32>
    tpu.vector_store %arg3[%c42, %c0_84], %249 {strides = array<i32>} : memref<64x128xf32, #tpu.memory_space<vmem>>, vector<1x128xf32>,
    %c21 = arith.constant 21 : index
    %c0_85 = arith.constant 0 : index
    %250 = vector.load %arg3[%c21, %c0_85] : memref<64x128xf32, #tpu.memory_space<vmem>>, vector<1x128xf32>
    %251 = vector.shape_cast %250 : vector<1x128xf32> to vector<128xf32>
    %252 = vector.shape_cast %246 : vector<128xf32> to vector<1x128xf32>
    tpu.vector_store %arg3[%c21, %c0_85], %252 {strides = array<i32>} : memref<64x128xf32, #tpu.memory_space<vmem>>, vector<1x128xf32>,
    %c3_86 = arith.constant 3 : index
    %c0_87 = arith.constant 0 : index
    %253 = vector.load %arg2[%c3_86, %c0_87] : memref<32x128xf32, #tpu.memory_space<vmem>>, vector<1x128xf32>
    %254 = vector.shape_cast %253 : vector<1x128xf32> to vector<128xf32>
    %c4_88 = arith.constant 4 : index
    %c0_89 = arith.constant 0 : index
    %255 = vector.load %arg2[%c4_88, %c0_89] : memref<32x128xf32, #tpu.memory_space<vmem>>, vector<1x128xf32>
    %256 = vector.shape_cast %255 : vector<1x128xf32> to vector<128xf32>
    %c5_90 = arith.constant 5 : index
    %c0_91 = arith.constant 0 : index
    %257 = vector.load %arg2[%c5_90, %c0_91] : memref<32x128xf32, #tpu.memory_space<vmem>>, vector<1x128xf32>
    %258 = vector.shape_cast %257 : vector<1x128xf32> to vector<128xf32>
    %259 = vector.extract_strided_slice %1 {offsets = [3, 0], sizes = [1, 128], strides = [1, 1]} : vector<8x128xf32> to vector<1x128xf32>
    %260 = vector.shape_cast %259 : vector<1x128xf32> to vector<128xf32>
    %261 = arith.mulf %203, %254 : vector<128xf32>
    %262 = arith.mulf %205, %256 : vector<128xf32>
    %263 = arith.addf %261, %262 : vector<128xf32>
    %264 = arith.mulf %207, %258 : vector<128xf32>
    %265 = arith.addf %263, %264 : vector<128xf32>
    %266 = arith.mulf %209, %260 : vector<128xf32>
    %267 = arith.addf %265, %266 : vector<128xf32>
    %c43 = arith.constant 43 : index
    %c0_92 = arith.constant 0 : index
    %268 = vector.load %arg3[%c43, %c0_92] : memref<64x128xf32, #tpu.memory_space<vmem>>, vector<1x128xf32>
    %269 = vector.shape_cast %268 : vector<1x128xf32> to vector<128xf32>
    %270 = vector.shape_cast %267 : vector<128xf32> to vector<1x128xf32>
    tpu.vector_store %arg3[%c43, %c0_92], %270 {strides = array<i32>} : memref<64x128xf32, #tpu.memory_space<vmem>>, vector<1x128xf32>,
    %c29 = arith.constant 29 : index
    %c0_93 = arith.constant 0 : index
    %271 = vector.load %arg3[%c29, %c0_93] : memref<64x128xf32, #tpu.memory_space<vmem>>, vector<1x128xf32>
    %272 = vector.shape_cast %271 : vector<1x128xf32> to vector<128xf32>
    %273 = vector.shape_cast %267 : vector<128xf32> to vector<1x128xf32>
    tpu.vector_store %arg3[%c29, %c0_93], %273 {strides = array<i32>} : memref<64x128xf32, #tpu.memory_space<vmem>>, vector<1x128xf32>,
    %c6_94 = arith.constant 6 : index
    %c0_95 = arith.constant 0 : index
    %274 = vector.load %arg2[%c6_94, %c0_95] : memref<32x128xf32, #tpu.memory_space<vmem>>, vector<1x128xf32>
    %275 = vector.shape_cast %274 : vector<1x128xf32> to vector<128xf32>
    %c7_96 = arith.constant 7 : index
    %c0_97 = arith.constant 0 : index
    %276 = vector.load %arg2[%c7_96, %c0_97] : memref<32x128xf32, #tpu.memory_space<vmem>>, vector<1x128xf32>
    %277 = vector.shape_cast %276 : vector<1x128xf32> to vector<128xf32>
    %c8_98 = arith.constant 8 : index
    %c0_99 = arith.constant 0 : index
    %278 = vector.load %arg2[%c8_98, %c0_99] : memref<32x128xf32, #tpu.memory_space<vmem>>, vector<1x128xf32>
    %279 = vector.shape_cast %278 : vector<1x128xf32> to vector<128xf32>
    %c9_100 = arith.constant 9 : index
    %c0_101 = arith.constant 0 : index
    %280 = vector.load %arg2[%c9_100, %c0_101] : memref<32x128xf32, #tpu.memory_space<vmem>>, vector<1x128xf32>
    %281 = vector.shape_cast %280 : vector<1x128xf32> to vector<128xf32>
    %282 = vector.extract_strided_slice %1 {offsets = [4, 0], sizes = [1, 128], strides = [1, 1]} : vector<8x128xf32> to vector<1x128xf32>
    %283 = vector.shape_cast %282 : vector<1x128xf32> to vector<128xf32>
    %284 = arith.mulf %203, %275 : vector<128xf32>
    %285 = arith.mulf %205, %277 : vector<128xf32>
    %286 = arith.addf %284, %285 : vector<128xf32>
    %287 = arith.mulf %207, %279 : vector<128xf32>
    %288 = arith.addf %286, %287 : vector<128xf32>
    %289 = arith.mulf %209, %281 : vector<128xf32>
    %290 = arith.addf %288, %289 : vector<128xf32>
    %291 = arith.mulf %211, %283 : vector<128xf32>
    %292 = arith.addf %290, %291 : vector<128xf32>
    %c44 = arith.constant 44 : index
    %c0_102 = arith.constant 0 : index
    %293 = vector.load %arg3[%c44, %c0_102] : memref<64x128xf32, #tpu.memory_space<vmem>>, vector<1x128xf32>
    %294 = vector.shape_cast %293 : vector<1x128xf32> to vector<128xf32>
    %295 = vector.shape_cast %292 : vector<128xf32> to vector<1x128xf32>
    tpu.vector_store %arg3[%c44, %c0_102], %295 {strides = array<i32>} : memref<64x128xf32, #tpu.memory_space<vmem>>, vector<1x128xf32>,
    %c37 = arith.constant 37 : index
    %c0_103 = arith.constant 0 : index
    %296 = vector.load %arg3[%c37, %c0_103] : memref<64x128xf32, #tpu.memory_space<vmem>>, vector<1x128xf32>
    %297 = vector.shape_cast %296 : vector<1x128xf32> to vector<128xf32>
    %298 = vector.shape_cast %292 : vector<128xf32> to vector<1x128xf32>
    tpu.vector_store %arg3[%c37, %c0_103], %298 {strides = array<i32>} : memref<64x128xf32, #tpu.memory_space<vmem>>, vector<1x128xf32>,
    %299 = arith.mulf %203, %203 : vector<128xf32>
    %300 = arith.mulf %205, %205 : vector<128xf32>
    %301 = arith.addf %299, %300 : vector<128xf32>
    %302 = arith.mulf %207, %207 : vector<128xf32>
    %303 = arith.addf %301, %302 : vector<128xf32>
    %304 = arith.mulf %209, %209 : vector<128xf32>
    %305 = arith.addf %303, %304 : vector<128xf32>
    %306 = arith.mulf %211, %211 : vector<128xf32>
    %307 = arith.addf %305, %306 : vector<128xf32>
    %308 = arith.mulf %213, %213 : vector<128xf32>
    %309 = arith.addf %307, %308 : vector<128xf32>
    %c45 = arith.constant 45 : index
    %c0_104 = arith.constant 0 : index
    %310 = vector.load %arg3[%c45, %c0_104] : memref<64x128xf32, #tpu.memory_space<vmem>>, vector<1x128xf32>
    %311 = vector.shape_cast %310 : vector<1x128xf32> to vector<128xf32>
    %312 = vector.shape_cast %309 : vector<128xf32> to vector<1x128xf32>
    tpu.vector_store %arg3[%c45, %c0_104], %312 {strides = array<i32>} : memref<64x128xf32, #tpu.memory_space<vmem>>, vector<1x128xf32>,
    %c15 = arith.constant 15 : index
    %c0_105 = arith.constant 0 : index
    %313 = vector.load %arg2[%c15, %c0_105] : memref<32x128xf32, #tpu.memory_space<vmem>>, vector<1x128xf32>
    %314 = vector.shape_cast %313 : vector<1x128xf32> to vector<128xf32>
    %c16_106 = arith.constant 16 : index
    %c0_107 = arith.constant 0 : index
    %315 = vector.load %arg2[%c16_106, %c0_107] : memref<32x128xf32, #tpu.memory_space<vmem>>, vector<1x128xf32>
    %316 = vector.shape_cast %315 : vector<1x128xf32> to vector<128xf32>
    %c17_108 = arith.constant 17 : index
    %c0_109 = arith.constant 0 : index
    %317 = vector.load %arg2[%c17_108, %c0_109] : memref<32x128xf32, #tpu.memory_space<vmem>>, vector<1x128xf32>
    %318 = vector.shape_cast %317 : vector<1x128xf32> to vector<128xf32>
    %c18_110 = arith.constant 18 : index
    %c0_111 = arith.constant 0 : index
    %319 = vector.load %arg2[%c18_110, %c0_111] : memref<32x128xf32, #tpu.memory_space<vmem>>, vector<1x128xf32>
    %320 = vector.shape_cast %319 : vector<1x128xf32> to vector<128xf32>
    %c19_112 = arith.constant 19 : index
    %c0_113 = arith.constant 0 : index
    %321 = vector.load %arg2[%c19_112, %c0_113] : memref<32x128xf32, #tpu.memory_space<vmem>>, vector<1x128xf32>
    %322 = vector.shape_cast %321 : vector<1x128xf32> to vector<128xf32>
    %c20_114 = arith.constant 20 : index
    %c0_115 = arith.constant 0 : index
    %323 = vector.load %arg2[%c20_114, %c0_115] : memref<32x128xf32, #tpu.memory_space<vmem>>, vector<1x128xf32>
    %324 = vector.shape_cast %323 : vector<1x128xf32> to vector<128xf32>
    %325 = vector.extract_strided_slice %1 {offsets = [6, 0], sizes = [1, 128], strides = [1, 1]} : vector<8x128xf32> to vector<1x128xf32>
    %326 = vector.shape_cast %325 : vector<1x128xf32> to vector<128xf32>
    %327 = vector.extract_strided_slice %1 {offsets = [0, 0], sizes = [1, 128], strides = [1, 1]} : vector<8x128xf32> to vector<1x128xf32>
    %328 = vector.shape_cast %327 : vector<1x128xf32> to vector<128xf32>
    %329 = arith.mulf %314, %328 : vector<128xf32>
    %c48 = arith.constant 48 : index
    %c0_116 = arith.constant 0 : index
    %330 = vector.load %arg3[%c48, %c0_116] : memref<64x128xf32, #tpu.memory_space<vmem>>, vector<1x128xf32>
    %331 = vector.shape_cast %330 : vector<1x128xf32> to vector<128xf32>
    %332 = vector.shape_cast %329 : vector<128xf32> to vector<1x128xf32>
    tpu.vector_store %arg3[%c48, %c0_116], %332 {strides = array<i32>} : memref<64x128xf32, #tpu.memory_space<vmem>>, vector<1x128xf32>,
    %c6_117 = arith.constant 6 : index
    %c0_118 = arith.constant 0 : index
    %333 = vector.load %arg3[%c6_117, %c0_118] : memref<64x128xf32, #tpu.memory_space<vmem>>, vector<1x128xf32>
    %334 = vector.shape_cast %333 : vector<1x128xf32> to vector<128xf32>
    %335 = vector.shape_cast %329 : vector<128xf32> to vector<1x128xf32>
    tpu.vector_store %arg3[%c6_117, %c0_118], %335 {strides = array<i32>} : memref<64x128xf32, #tpu.memory_space<vmem>>, vector<1x128xf32>,
    %c0_119 = arith.constant 0 : index
    %c0_120 = arith.constant 0 : index
    %336 = vector.load %arg2[%c0_119, %c0_120] : memref<32x128xf32, #tpu.memory_space<vmem>>, vector<1x128xf32>
    %337 = vector.shape_cast %336 : vector<1x128xf32> to vector<128xf32>
    %338 = vector.extract_strided_slice %1 {offsets = [1, 0], sizes = [1, 128], strides = [1, 1]} : vector<8x128xf32> to vector<1x128xf32>
    %339 = vector.shape_cast %338 : vector<1x128xf32> to vector<128xf32>
    %340 = arith.mulf %314, %337 : vector<128xf32>
    %341 = arith.mulf %316, %339 : vector<128xf32>
    %342 = arith.addf %340, %341 : vector<128xf32>
    %c49 = arith.constant 49 : index
    %c0_121 = arith.constant 0 : index
    %343 = vector.load %arg3[%c49, %c0_121] : memref<64x128xf32, #tpu.memory_space<vmem>>, vector<1x128xf32>
    %344 = vector.shape_cast %343 : vector<1x128xf32> to vector<128xf32>
    %345 = vector.shape_cast %342 : vector<128xf32> to vector<1x128xf32>
    tpu.vector_store %arg3[%c49, %c0_121], %345 {strides = array<i32>} : memref<64x128xf32, #tpu.memory_space<vmem>>, vector<1x128xf32>,
    %c14_122 = arith.constant 14 : index
    %c0_123 = arith.constant 0 : index
    %346 = vector.load %arg3[%c14_122, %c0_123] : memref<64x128xf32, #tpu.memory_space<vmem>>, vector<1x128xf32>
    %347 = vector.shape_cast %346 : vector<1x128xf32> to vector<128xf32>
    %348 = vector.shape_cast %342 : vector<128xf32> to vector<1x128xf32>
    tpu.vector_store %arg3[%c14_122, %c0_123], %348 {strides = array<i32>} : memref<64x128xf32, #tpu.memory_space<vmem>>, vector<1x128xf32>,
    %c1_124 = arith.constant 1 : index
    %c0_125 = arith.constant 0 : index
    %349 = vector.load %arg2[%c1_124, %c0_125] : memref<32x128xf32, #tpu.memory_space<vmem>>, vector<1x128xf32>
    %350 = vector.shape_cast %349 : vector<1x128xf32> to vector<128xf32>
    %c2_126 = arith.constant 2 : index
    %c0_127 = arith.constant 0 : index
    %351 = vector.load %arg2[%c2_126, %c0_127] : memref<32x128xf32, #tpu.memory_space<vmem>>, vector<1x128xf32>
    %352 = vector.shape_cast %351 : vector<1x128xf32> to vector<128xf32>
    %353 = vector.extract_strided_slice %1 {offsets = [2, 0], sizes = [1, 128], strides = [1, 1]} : vector<8x128xf32> to vector<1x128xf32>
    %354 = vector.shape_cast %353 : vector<1x128xf32> to vector<128xf32>
    %355 = arith.mulf %314, %350 : vector<128xf32>
    %356 = arith.mulf %316, %352 : vector<128xf32>
    %357 = arith.addf %355, %356 : vector<128xf32>
    %358 = arith.mulf %318, %354 : vector<128xf32>
    %359 = arith.addf %357, %358 : vector<128xf32>
    %c50 = arith.constant 50 : index
    %c0_128 = arith.constant 0 : index
    %360 = vector.load %arg3[%c50, %c0_128] : memref<64x128xf32, #tpu.memory_space<vmem>>, vector<1x128xf32>
    %361 = vector.shape_cast %360 : vector<1x128xf32> to vector<128xf32>
    %362 = vector.shape_cast %359 : vector<128xf32> to vector<1x128xf32>
    tpu.vector_store %arg3[%c50, %c0_128], %362 {strides = array<i32>} : memref<64x128xf32, #tpu.memory_space<vmem>>, vector<1x128xf32>,
    %c22 = arith.constant 22 : index
    %c0_129 = arith.constant 0 : index
    %363 = vector.load %arg3[%c22, %c0_129] : memref<64x128xf32, #tpu.memory_space<vmem>>, vector<1x128xf32>
    %364 = vector.shape_cast %363 : vector<1x128xf32> to vector<128xf32>
    %365 = vector.shape_cast %359 : vector<128xf32> to vector<1x128xf32>
    tpu.vector_store %arg3[%c22, %c0_129], %365 {strides = array<i32>} : memref<64x128xf32, #tpu.memory_space<vmem>>, vector<1x128xf32>,
    %c3_130 = arith.constant 3 : index
    %c0_131 = arith.constant 0 : index
    %366 = vector.load %arg2[%c3_130, %c0_131] : memref<32x128xf32, #tpu.memory_space<vmem>>, vector<1x128xf32>
    %367 = vector.shape_cast %366 : vector<1x128xf32> to vector<128xf32>
    %c4_132 = arith.constant 4 : index
    %c0_133 = arith.constant 0 : index
    %368 = vector.load %arg2[%c4_132, %c0_133] : memref<32x128xf32, #tpu.memory_space<vmem>>, vector<1x128xf32>
    %369 = vector.shape_cast %368 : vector<1x128xf32> to vector<128xf32>
    %c5_134 = arith.constant 5 : index
    %c0_135 = arith.constant 0 : index
    %370 = vector.load %arg2[%c5_134, %c0_135] : memref<32x128xf32, #tpu.memory_space<vmem>>, vector<1x128xf32>
    %371 = vector.shape_cast %370 : vector<1x128xf32> to vector<128xf32>
    %372 = vector.extract_strided_slice %1 {offsets = [3, 0], sizes = [1, 128], strides = [1, 1]} : vector<8x128xf32> to vector<1x128xf32>
    %373 = vector.shape_cast %372 : vector<1x128xf32> to vector<128xf32>
    %374 = arith.mulf %314, %367 : vector<128xf32>
    %375 = arith.mulf %316, %369 : vector<128xf32>
    %376 = arith.addf %374, %375 : vector<128xf32>
    %377 = arith.mulf %318, %371 : vector<128xf32>
    %378 = arith.addf %376, %377 : vector<128xf32>
    %379 = arith.mulf %320, %373 : vector<128xf32>
    %380 = arith.addf %378, %379 : vector<128xf32>
    %c51 = arith.constant 51 : index
    %c0_136 = arith.constant 0 : index
    %381 = vector.load %arg3[%c51, %c0_136] : memref<64x128xf32, #tpu.memory_space<vmem>>, vector<1x128xf32>
    %382 = vector.shape_cast %381 : vector<1x128xf32> to vector<128xf32>
    %383 = vector.shape_cast %380 : vector<128xf32> to vector<1x128xf32>
    tpu.vector_store %arg3[%c51, %c0_136], %383 {strides = array<i32>} : memref<64x128xf32, #tpu.memory_space<vmem>>, vector<1x128xf32>,
    %c30 = arith.constant 30 : index
    %c0_137 = arith.constant 0 : index
    %384 = vector.load %arg3[%c30, %c0_137] : memref<64x128xf32, #tpu.memory_space<vmem>>, vector<1x128xf32>
    %385 = vector.shape_cast %384 : vector<1x128xf32> to vector<128xf32>
    %386 = vector.shape_cast %380 : vector<128xf32> to vector<1x128xf32>
    tpu.vector_store %arg3[%c30, %c0_137], %386 {strides = array<i32>} : memref<64x128xf32, #tpu.memory_space<vmem>>, vector<1x128xf32>,
    %c6_138 = arith.constant 6 : index
    %c0_139 = arith.constant 0 : index
    %387 = vector.load %arg2[%c6_138, %c0_139] : memref<32x128xf32, #tpu.memory_space<vmem>>, vector<1x128xf32>
    %388 = vector.shape_cast %387 : vector<1x128xf32> to vector<128xf32>
    %c7_140 = arith.constant 7 : index
    %c0_141 = arith.constant 0 : index
    %389 = vector.load %arg2[%c7_140, %c0_141] : memref<32x128xf32, #tpu.memory_space<vmem>>, vector<1x128xf32>
    %390 = vector.shape_cast %389 : vector<1x128xf32> to vector<128xf32>
    %c8_142 = arith.constant 8 : index
    %c0_143 = arith.constant 0 : index
    %391 = vector.load %arg2[%c8_142, %c0_143] : memref<32x128xf32, #tpu.memory_space<vmem>>, vector<1x128xf32>
    %392 = vector.shape_cast %391 : vector<1x128xf32> to vector<128xf32>
    %c9_144 = arith.constant 9 : index
    %c0_145 = arith.constant 0 : index
    %393 = vector.load %arg2[%c9_144, %c0_145] : memref<32x128xf32, #tpu.memory_space<vmem>>, vector<1x128xf32>
    %394 = vector.shape_cast %393 : vector<1x128xf32> to vector<128xf32>
    %395 = vector.extract_strided_slice %1 {offsets = [4, 0], sizes = [1, 128], strides = [1, 1]} : vector<8x128xf32> to vector<1x128xf32>
    %396 = vector.shape_cast %395 : vector<1x128xf32> to vector<128xf32>
    %397 = arith.mulf %314, %388 : vector<128xf32>
    %398 = arith.mulf %316, %390 : vector<128xf32>
    %399 = arith.addf %397, %398 : vector<128xf32>
    %400 = arith.mulf %318, %392 : vector<128xf32>
    %401 = arith.addf %399, %400 : vector<128xf32>
    %402 = arith.mulf %320, %394 : vector<128xf32>
    %403 = arith.addf %401, %402 : vector<128xf32>
    %404 = arith.mulf %322, %396 : vector<128xf32>
    %405 = arith.addf %403, %404 : vector<128xf32>
    %c52 = arith.constant 52 : index
    %c0_146 = arith.constant 0 : index
    %406 = vector.load %arg3[%c52, %c0_146] : memref<64x128xf32, #tpu.memory_space<vmem>>, vector<1x128xf32>
    %407 = vector.shape_cast %406 : vector<1x128xf32> to vector<128xf32>
    %408 = vector.shape_cast %405 : vector<128xf32> to vector<1x128xf32>
    tpu.vector_store %arg3[%c52, %c0_146], %408 {strides = array<i32>} : memref<64x128xf32, #tpu.memory_space<vmem>>, vector<1x128xf32>,
    %c38 = arith.constant 38 : index
    %c0_147 = arith.constant 0 : index
    %409 = vector.load %arg3[%c38, %c0_147] : memref<64x128xf32, #tpu.memory_space<vmem>>, vector<1x128xf32>
    %410 = vector.shape_cast %409 : vector<1x128xf32> to vector<128xf32>
    %411 = vector.shape_cast %405 : vector<128xf32> to vector<1x128xf32>
    tpu.vector_store %arg3[%c38, %c0_147], %411 {strides = array<i32>} : memref<64x128xf32, #tpu.memory_space<vmem>>, vector<1x128xf32>,
    %c10_148 = arith.constant 10 : index
    %c0_149 = arith.constant 0 : index
    %412 = vector.load %arg2[%c10_148, %c0_149] : memref<32x128xf32, #tpu.memory_space<vmem>>, vector<1x128xf32>
    %413 = vector.shape_cast %412 : vector<1x128xf32> to vector<128xf32>
    %c11_150 = arith.constant 11 : index
    %c0_151 = arith.constant 0 : index
    %414 = vector.load %arg2[%c11_150, %c0_151] : memref<32x128xf32, #tpu.memory_space<vmem>>, vector<1x128xf32>
    %415 = vector.shape_cast %414 : vector<1x128xf32> to vector<128xf32>
    %c12_152 = arith.constant 12 : index
    %c0_153 = arith.constant 0 : index
    %416 = vector.load %arg2[%c12_152, %c0_153] : memref<32x128xf32, #tpu.memory_space<vmem>>, vector<1x128xf32>
    %417 = vector.shape_cast %416 : vector<1x128xf32> to vector<128xf32>
    %c13_154 = arith.constant 13 : index
    %c0_155 = arith.constant 0 : index
    %418 = vector.load %arg2[%c13_154, %c0_155] : memref<32x128xf32, #tpu.memory_space<vmem>>, vector<1x128xf32>
    %419 = vector.shape_cast %418 : vector<1x128xf32> to vector<128xf32>
    %c14_156 = arith.constant 14 : index
    %c0_157 = arith.constant 0 : index
    %420 = vector.load %arg2[%c14_156, %c0_157] : memref<32x128xf32, #tpu.memory_space<vmem>>, vector<1x128xf32>
    %421 = vector.shape_cast %420 : vector<1x128xf32> to vector<128xf32>
    %422 = vector.extract_strided_slice %1 {offsets = [5, 0], sizes = [1, 128], strides = [1, 1]} : vector<8x128xf32> to vector<1x128xf32>
    %423 = vector.shape_cast %422 : vector<1x128xf32> to vector<128xf32>
    %424 = arith.mulf %314, %413 : vector<128xf32>
    %425 = arith.mulf %316, %415 : vector<128xf32>
    %426 = arith.addf %424, %425 : vector<128xf32>
    %427 = arith.mulf %318, %417 : vector<128xf32>
    %428 = arith.addf %426, %427 : vector<128xf32>
    %429 = arith.mulf %320, %419 : vector<128xf32>
    %430 = arith.addf %428, %429 : vector<128xf32>
    %431 = arith.mulf %322, %421 : vector<128xf32>
    %432 = arith.addf %430, %431 : vector<128xf32>
    %433 = arith.mulf %324, %423 : vector<128xf32>
    %434 = arith.addf %432, %433 : vector<128xf32>
    %c53 = arith.constant 53 : index
    %c0_158 = arith.constant 0 : index
    %435 = vector.load %arg3[%c53, %c0_158] : memref<64x128xf32, #tpu.memory_space<vmem>>, vector<1x128xf32>
    %436 = vector.shape_cast %435 : vector<1x128xf32> to vector<128xf32>
    %437 = vector.shape_cast %434 : vector<128xf32> to vector<1x128xf32>
    tpu.vector_store %arg3[%c53, %c0_158], %437 {strides = array<i32>} : memref<64x128xf32, #tpu.memory_space<vmem>>, vector<1x128xf32>,
    %c46 = arith.constant 46 : index
    %c0_159 = arith.constant 0 : index
    %438 = vector.load %arg3[%c46, %c0_159] : memref<64x128xf32, #tpu.memory_space<vmem>>, vector<1x128xf32>
    %439 = vector.shape_cast %438 : vector<1x128xf32> to vector<128xf32>
    %440 = vector.shape_cast %434 : vector<128xf32> to vector<1x128xf32>
    tpu.vector_store %arg3[%c46, %c0_159], %440 {strides = array<i32>} : memref<64x128xf32, #tpu.memory_space<vmem>>, vector<1x128xf32>,
    %441 = arith.mulf %314, %314 : vector<128xf32>
    %442 = arith.mulf %316, %316 : vector<128xf32>
    %443 = arith.addf %441, %442 : vector<128xf32>
    %444 = arith.mulf %318, %318 : vector<128xf32>
    %445 = arith.addf %443, %444 : vector<128xf32>
    %446 = arith.mulf %320, %320 : vector<128xf32>
    %447 = arith.addf %445, %446 : vector<128xf32>
    %448 = arith.mulf %322, %322 : vector<128xf32>
    %449 = arith.addf %447, %448 : vector<128xf32>
    %450 = arith.mulf %324, %324 : vector<128xf32>
    %451 = arith.addf %449, %450 : vector<128xf32>
    %452 = arith.mulf %326, %326 : vector<128xf32>
    %453 = arith.addf %451, %452 : vector<128xf32>
    %c54 = arith.constant 54 : index
    %c0_160 = arith.constant 0 : index
    %454 = vector.load %arg3[%c54, %c0_160] : memref<64x128xf32, #tpu.memory_space<vmem>>, vector<1x128xf32>
    %455 = vector.shape_cast %454 : vector<1x128xf32> to vector<128xf32>
    %456 = vector.shape_cast %453 : vector<128xf32> to vector<1x128xf32>
    tpu.vector_store %arg3[%c54, %c0_160], %456 {strides = array<i32>} : memref<64x128xf32, #tpu.memory_space<vmem>>, vector<1x128xf32>,
    %c21_161 = arith.constant 21 : index
    %c0_162 = arith.constant 0 : index
    %457 = vector.load %arg2[%c21_161, %c0_162] : memref<32x128xf32, #tpu.memory_space<vmem>>, vector<1x128xf32>
    %458 = vector.shape_cast %457 : vector<1x128xf32> to vector<128xf32>
    %c22_163 = arith.constant 22 : index
    %c0_164 = arith.constant 0 : index
    %459 = vector.load %arg2[%c22_163, %c0_164] : memref<32x128xf32, #tpu.memory_space<vmem>>, vector<1x128xf32>
    %460 = vector.shape_cast %459 : vector<1x128xf32> to vector<128xf32>
    %c23 = arith.constant 23 : index
    %c0_165 = arith.constant 0 : index
    %461 = vector.load %arg2[%c23, %c0_165] : memref<32x128xf32, #tpu.memory_space<vmem>>, vector<1x128xf32>
    %462 = vector.shape_cast %461 : vector<1x128xf32> to vector<128xf32>
    %c24_166 = arith.constant 24 : index
    %c0_167 = arith.constant 0 : index
    %463 = vector.load %arg2[%c24_166, %c0_167] : memref<32x128xf32, #tpu.memory_space<vmem>>, vector<1x128xf32>
    %464 = vector.shape_cast %463 : vector<1x128xf32> to vector<128xf32>
    %c25_168 = arith.constant 25 : index
    %c0_169 = arith.constant 0 : index
    %465 = vector.load %arg2[%c25_168, %c0_169] : memref<32x128xf32, #tpu.memory_space<vmem>>, vector<1x128xf32>
    %466 = vector.shape_cast %465 : vector<1x128xf32> to vector<128xf32>
    %c26_170 = arith.constant 26 : index
    %c0_171 = arith.constant 0 : index
    %467 = vector.load %arg2[%c26_170, %c0_171] : memref<32x128xf32, #tpu.memory_space<vmem>>, vector<1x128xf32>
    %468 = vector.shape_cast %467 : vector<1x128xf32> to vector<128xf32>
    %c27_172 = arith.constant 27 : index
    %c0_173 = arith.constant 0 : index
    %469 = vector.load %arg2[%c27_172, %c0_173] : memref<32x128xf32, #tpu.memory_space<vmem>>, vector<1x128xf32>
    %470 = vector.shape_cast %469 : vector<1x128xf32> to vector<128xf32>
    %471 = vector.extract_strided_slice %1 {offsets = [7, 0], sizes = [1, 128], strides = [1, 1]} : vector<8x128xf32> to vector<1x128xf32>
    %472 = vector.shape_cast %471 : vector<1x128xf32> to vector<128xf32>
    %473 = vector.extract_strided_slice %1 {offsets = [0, 0], sizes = [1, 128], strides = [1, 1]} : vector<8x128xf32> to vector<1x128xf32>
    %474 = vector.shape_cast %473 : vector<1x128xf32> to vector<128xf32>
    %475 = arith.mulf %458, %474 : vector<128xf32>
    %c56 = arith.constant 56 : index
    %c0_174 = arith.constant 0 : index
    %476 = vector.load %arg3[%c56, %c0_174] : memref<64x128xf32, #tpu.memory_space<vmem>>, vector<1x128xf32>
    %477 = vector.shape_cast %476 : vector<1x128xf32> to vector<128xf32>
    %478 = vector.shape_cast %475 : vector<128xf32> to vector<1x128xf32>
    tpu.vector_store %arg3[%c56, %c0_174], %478 {strides = array<i32>} : memref<64x128xf32, #tpu.memory_space<vmem>>, vector<1x128xf32>,
    %c7_175 = arith.constant 7 : index
    %c0_176 = arith.constant 0 : index
    %479 = vector.load %arg3[%c7_175, %c0_176] : memref<64x128xf32, #tpu.memory_space<vmem>>, vector<1x128xf32>
    %480 = vector.shape_cast %479 : vector<1x128xf32> to vector<128xf32>
    %481 = vector.shape_cast %475 : vector<128xf32> to vector<1x128xf32>
    tpu.vector_store %arg3[%c7_175, %c0_176], %481 {strides = array<i32>} : memref<64x128xf32, #tpu.memory_space<vmem>>, vector<1x128xf32>,
    %c0_177 = arith.constant 0 : index
    %c0_178 = arith.constant 0 : index
    %482 = vector.load %arg2[%c0_177, %c0_178] : memref<32x128xf32, #tpu.memory_space<vmem>>, vector<1x128xf32>
    %483 = vector.shape_cast %482 : vector<1x128xf32> to vector<128xf32>
    %484 = vector.extract_strided_slice %1 {offsets = [1, 0], sizes = [1, 128], strides = [1, 1]} : vector<8x128xf32> to vector<1x128xf32>
    %485 = vector.shape_cast %484 : vector<1x128xf32> to vector<128xf32>
    %486 = arith.mulf %458, %483 : vector<128xf32>
    %487 = arith.mulf %460, %485 : vector<128xf32>
    %488 = arith.addf %486, %487 : vector<128xf32>
    %c57 = arith.constant 57 : index
    %c0_179 = arith.constant 0 : index
    %489 = vector.load %arg3[%c57, %c0_179] : memref<64x128xf32, #tpu.memory_space<vmem>>, vector<1x128xf32>
    %490 = vector.shape_cast %489 : vector<1x128xf32> to vector<128xf32>
    %491 = vector.shape_cast %488 : vector<128xf32> to vector<1x128xf32>
    tpu.vector_store %arg3[%c57, %c0_179], %491 {strides = array<i32>} : memref<64x128xf32, #tpu.memory_space<vmem>>, vector<1x128xf32>,
    %c15_180 = arith.constant 15 : index
    %c0_181 = arith.constant 0 : index
    %492 = vector.load %arg3[%c15_180, %c0_181] : memref<64x128xf32, #tpu.memory_space<vmem>>, vector<1x128xf32>
    %493 = vector.shape_cast %492 : vector<1x128xf32> to vector<128xf32>
    %494 = vector.shape_cast %488 : vector<128xf32> to vector<1x128xf32>
    tpu.vector_store %arg3[%c15_180, %c0_181], %494 {strides = array<i32>} : memref<64x128xf32, #tpu.memory_space<vmem>>, vector<1x128xf32>,
    %c1_182 = arith.constant 1 : index
    %c0_183 = arith.constant 0 : index
    %495 = vector.load %arg2[%c1_182, %c0_183] : memref<32x128xf32, #tpu.memory_space<vmem>>, vector<1x128xf32>
    %496 = vector.shape_cast %495 : vector<1x128xf32> to vector<128xf32>
    %c2_184 = arith.constant 2 : index
    %c0_185 = arith.constant 0 : index
    %497 = vector.load %arg2[%c2_184, %c0_185] : memref<32x128xf32, #tpu.memory_space<vmem>>, vector<1x128xf32>
    %498 = vector.shape_cast %497 : vector<1x128xf32> to vector<128xf32>
    %499 = vector.extract_strided_slice %1 {offsets = [2, 0], sizes = [1, 128], strides = [1, 1]} : vector<8x128xf32> to vector<1x128xf32>
    %500 = vector.shape_cast %499 : vector<1x128xf32> to vector<128xf32>
    %501 = arith.mulf %458, %496 : vector<128xf32>
    %502 = arith.mulf %460, %498 : vector<128xf32>
    %503 = arith.addf %501, %502 : vector<128xf32>
    %504 = arith.mulf %462, %500 : vector<128xf32>
    %505 = arith.addf %503, %504 : vector<128xf32>
    %c58 = arith.constant 58 : index
    %c0_186 = arith.constant 0 : index
    %506 = vector.load %arg3[%c58, %c0_186] : memref<64x128xf32, #tpu.memory_space<vmem>>, vector<1x128xf32>
    %507 = vector.shape_cast %506 : vector<1x128xf32> to vector<128xf32>
    %508 = vector.shape_cast %505 : vector<128xf32> to vector<1x128xf32>
    tpu.vector_store %arg3[%c58, %c0_186], %508 {strides = array<i32>} : memref<64x128xf32, #tpu.memory_space<vmem>>, vector<1x128xf32>,
    %c23_187 = arith.constant 23 : index
    %c0_188 = arith.constant 0 : index
    %509 = vector.load %arg3[%c23_187, %c0_188] : memref<64x128xf32, #tpu.memory_space<vmem>>, vector<1x128xf32>
    %510 = vector.shape_cast %509 : vector<1x128xf32> to vector<128xf32>
    %511 = vector.shape_cast %505 : vector<128xf32> to vector<1x128xf32>
    tpu.vector_store %arg3[%c23_187, %c0_188], %511 {strides = array<i32>} : memref<64x128xf32, #tpu.memory_space<vmem>>, vector<1x128xf32>,
    %c3_189 = arith.constant 3 : index
    %c0_190 = arith.constant 0 : index
    %512 = vector.load %arg2[%c3_189, %c0_190] : memref<32x128xf32, #tpu.memory_space<vmem>>, vector<1x128xf32>
    %513 = vector.shape_cast %512 : vector<1x128xf32> to vector<128xf32>
    %c4_191 = arith.constant 4 : index
    %c0_192 = arith.constant 0 : index
    %514 = vector.load %arg2[%c4_191, %c0_192] : memref<32x128xf32, #tpu.memory_space<vmem>>, vector<1x128xf32>
    %515 = vector.shape_cast %514 : vector<1x128xf32> to vector<128xf32>
    %c5_193 = arith.constant 5 : index
    %c0_194 = arith.constant 0 : index
    %516 = vector.load %arg2[%c5_193, %c0_194] : memref<32x128xf32, #tpu.memory_space<vmem>>, vector<1x128xf32>
    %517 = vector.shape_cast %516 : vector<1x128xf32> to vector<128xf32>
    %518 = vector.extract_strided_slice %1 {offsets = [3, 0], sizes = [1, 128], strides = [1, 1]} : vector<8x128xf32> to vector<1x128xf32>
    %519 = vector.shape_cast %518 : vector<1x128xf32> to vector<128xf32>
    %520 = arith.mulf %458, %513 : vector<128xf32>
    %521 = arith.mulf %460, %515 : vector<128xf32>
    %522 = arith.addf %520, %521 : vector<128xf32>
    %523 = arith.mulf %462, %517 : vector<128xf32>
    %524 = arith.addf %522, %523 : vector<128xf32>
    %525 = arith.mulf %464, %519 : vector<128xf32>
    %526 = arith.addf %524, %525 : vector<128xf32>
    %c59 = arith.constant 59 : index
    %c0_195 = arith.constant 0 : index
    %527 = vector.load %arg3[%c59, %c0_195] : memref<64x128xf32, #tpu.memory_space<vmem>>, vector<1x128xf32>
    %528 = vector.shape_cast %527 : vector<1x128xf32> to vector<128xf32>
    %529 = vector.shape_cast %526 : vector<128xf32> to vector<1x128xf32>
    tpu.vector_store %arg3[%c59, %c0_195], %529 {strides = array<i32>} : memref<64x128xf32, #tpu.memory_space<vmem>>, vector<1x128xf32>,
    %c31 = arith.constant 31 : index
    %c0_196 = arith.constant 0 : index
    %530 = vector.load %arg3[%c31, %c0_196] : memref<64x128xf32, #tpu.memory_space<vmem>>, vector<1x128xf32>
    %531 = vector.shape_cast %530 : vector<1x128xf32> to vector<128xf32>
    %532 = vector.shape_cast %526 : vector<128xf32> to vector<1x128xf32>
    tpu.vector_store %arg3[%c31, %c0_196], %532 {strides = array<i32>} : memref<64x128xf32, #tpu.memory_space<vmem>>, vector<1x128xf32>,
    %c6_197 = arith.constant 6 : index
    %c0_198 = arith.constant 0 : index
    %533 = vector.load %arg2[%c6_197, %c0_198] : memref<32x128xf32, #tpu.memory_space<vmem>>, vector<1x128xf32>
    %534 = vector.shape_cast %533 : vector<1x128xf32> to vector<128xf32>
    %c7_199 = arith.constant 7 : index
    %c0_200 = arith.constant 0 : index
    %535 = vector.load %arg2[%c7_199, %c0_200] : memref<32x128xf32, #tpu.memory_space<vmem>>, vector<1x128xf32>
    %536 = vector.shape_cast %535 : vector<1x128xf32> to vector<128xf32>
    %c8_201 = arith.constant 8 : index
    %c0_202 = arith.constant 0 : index
    %537 = vector.load %arg2[%c8_201, %c0_202] : memref<32x128xf32, #tpu.memory_space<vmem>>, vector<1x128xf32>
    %538 = vector.shape_cast %537 : vector<1x128xf32> to vector<128xf32>
    %c9_203 = arith.constant 9 : index
    %c0_204 = arith.constant 0 : index
    %539 = vector.load %arg2[%c9_203, %c0_204] : memref<32x128xf32, #tpu.memory_space<vmem>>, vector<1x128xf32>
    %540 = vector.shape_cast %539 : vector<1x128xf32> to vector<128xf32>
    %541 = vector.extract_strided_slice %1 {offsets = [4, 0], sizes = [1, 128], strides = [1, 1]} : vector<8x128xf32> to vector<1x128xf32>
    %542 = vector.shape_cast %541 : vector<1x128xf32> to vector<128xf32>
    %543 = arith.mulf %458, %534 : vector<128xf32>
    %544 = arith.mulf %460, %536 : vector<128xf32>
    %545 = arith.addf %543, %544 : vector<128xf32>
    %546 = arith.mulf %462, %538 : vector<128xf32>
    %547 = arith.addf %545, %546 : vector<128xf32>
    %548 = arith.mulf %464, %540 : vector<128xf32>
    %549 = arith.addf %547, %548 : vector<128xf32>
    %550 = arith.mulf %466, %542 : vector<128xf32>
    %551 = arith.addf %549, %550 : vector<128xf32>
    %c60 = arith.constant 60 : index
    %c0_205 = arith.constant 0 : index
    %552 = vector.load %arg3[%c60, %c0_205] : memref<64x128xf32, #tpu.memory_space<vmem>>, vector<1x128xf32>
    %553 = vector.shape_cast %552 : vector<1x128xf32> to vector<128xf32>
    %554 = vector.shape_cast %551 : vector<128xf32> to vector<1x128xf32>
    tpu.vector_store %arg3[%c60, %c0_205], %554 {strides = array<i32>} : memref<64x128xf32, #tpu.memory_space<vmem>>, vector<1x128xf32>,
    %c39 = arith.constant 39 : index
    %c0_206 = arith.constant 0 : index
    %555 = vector.load %arg3[%c39, %c0_206] : memref<64x128xf32, #tpu.memory_space<vmem>>, vector<1x128xf32>
    %556 = vector.shape_cast %555 : vector<1x128xf32> to vector<128xf32>
    %557 = vector.shape_cast %551 : vector<128xf32> to vector<1x128xf32>
    tpu.vector_store %arg3[%c39, %c0_206], %557 {strides = array<i32>} : memref<64x128xf32, #tpu.memory_space<vmem>>, vector<1x128xf32>,
    %c10_207 = arith.constant 10 : index
    %c0_208 = arith.constant 0 : index
    %558 = vector.load %arg2[%c10_207, %c0_208] : memref<32x128xf32, #tpu.memory_space<vmem>>, vector<1x128xf32>
    %559 = vector.shape_cast %558 : vector<1x128xf32> to vector<128xf32>
    %c11_209 = arith.constant 11 : index
    %c0_210 = arith.constant 0 : index
    %560 = vector.load %arg2[%c11_209, %c0_210] : memref<32x128xf32, #tpu.memory_space<vmem>>, vector<1x128xf32>
    %561 = vector.shape_cast %560 : vector<1x128xf32> to vector<128xf32>
    %c12_211 = arith.constant 12 : index
    %c0_212 = arith.constant 0 : index
    %562 = vector.load %arg2[%c12_211, %c0_212] : memref<32x128xf32, #tpu.memory_space<vmem>>, vector<1x128xf32>
    %563 = vector.shape_cast %562 : vector<1x128xf32> to vector<128xf32>
    %c13_213 = arith.constant 13 : index
    %c0_214 = arith.constant 0 : index
    %564 = vector.load %arg2[%c13_213, %c0_214] : memref<32x128xf32, #tpu.memory_space<vmem>>, vector<1x128xf32>
    %565 = vector.shape_cast %564 : vector<1x128xf32> to vector<128xf32>
    %c14_215 = arith.constant 14 : index
    %c0_216 = arith.constant 0 : index
    %566 = vector.load %arg2[%c14_215, %c0_216] : memref<32x128xf32, #tpu.memory_space<vmem>>, vector<1x128xf32>
    %567 = vector.shape_cast %566 : vector<1x128xf32> to vector<128xf32>
    %568 = vector.extract_strided_slice %1 {offsets = [5, 0], sizes = [1, 128], strides = [1, 1]} : vector<8x128xf32> to vector<1x128xf32>
    %569 = vector.shape_cast %568 : vector<1x128xf32> to vector<128xf32>
    %570 = arith.mulf %458, %559 : vector<128xf32>
    %571 = arith.mulf %460, %561 : vector<128xf32>
    %572 = arith.addf %570, %571 : vector<128xf32>
    %573 = arith.mulf %462, %563 : vector<128xf32>
    %574 = arith.addf %572, %573 : vector<128xf32>
    %575 = arith.mulf %464, %565 : vector<128xf32>
    %576 = arith.addf %574, %575 : vector<128xf32>
    %577 = arith.mulf %466, %567 : vector<128xf32>
    %578 = arith.addf %576, %577 : vector<128xf32>
    %579 = arith.mulf %468, %569 : vector<128xf32>
    %580 = arith.addf %578, %579 : vector<128xf32>
    %c61 = arith.constant 61 : index
    %c0_217 = arith.constant 0 : index
    %581 = vector.load %arg3[%c61, %c0_217] : memref<64x128xf32, #tpu.memory_space<vmem>>, vector<1x128xf32>
    %582 = vector.shape_cast %581 : vector<1x128xf32> to vector<128xf32>
    %583 = vector.shape_cast %580 : vector<128xf32> to vector<1x128xf32>
    tpu.vector_store %arg3[%c61, %c0_217], %583 {strides = array<i32>} : memref<64x128xf32, #tpu.memory_space<vmem>>, vector<1x128xf32>,
    %c47 = arith.constant 47 : index
    %c0_218 = arith.constant 0 : index
    %584 = vector.load %arg3[%c47, %c0_218] : memref<64x128xf32, #tpu.memory_space<vmem>>, vector<1x128xf32>
    %585 = vector.shape_cast %584 : vector<1x128xf32> to vector<128xf32>
    %586 = vector.shape_cast %580 : vector<128xf32> to vector<1x128xf32>
    tpu.vector_store %arg3[%c47, %c0_218], %586 {strides = array<i32>} : memref<64x128xf32, #tpu.memory_space<vmem>>, vector<1x128xf32>,
    %c15_219 = arith.constant 15 : index
    %c0_220 = arith.constant 0 : index
    %587 = vector.load %arg2[%c15_219, %c0_220] : memref<32x128xf32, #tpu.memory_space<vmem>>, vector<1x128xf32>
    %588 = vector.shape_cast %587 : vector<1x128xf32> to vector<128xf32>
    %c16_221 = arith.constant 16 : index
    %c0_222 = arith.constant 0 : index
    %589 = vector.load %arg2[%c16_221, %c0_222] : memref<32x128xf32, #tpu.memory_space<vmem>>, vector<1x128xf32>
    %590 = vector.shape_cast %589 : vector<1x128xf32> to vector<128xf32>
    %c17_223 = arith.constant 17 : index
    %c0_224 = arith.constant 0 : index
    %591 = vector.load %arg2[%c17_223, %c0_224] : memref<32x128xf32, #tpu.memory_space<vmem>>, vector<1x128xf32>
    %592 = vector.shape_cast %591 : vector<1x128xf32> to vector<128xf32>
    %c18_225 = arith.constant 18 : index
    %c0_226 = arith.constant 0 : index
    %593 = vector.load %arg2[%c18_225, %c0_226] : memref<32x128xf32, #tpu.memory_space<vmem>>, vector<1x128xf32>
    %594 = vector.shape_cast %593 : vector<1x128xf32> to vector<128xf32>
    %c19_227 = arith.constant 19 : index
    %c0_228 = arith.constant 0 : index
    %595 = vector.load %arg2[%c19_227, %c0_228] : memref<32x128xf32, #tpu.memory_space<vmem>>, vector<1x128xf32>
    %596 = vector.shape_cast %595 : vector<1x128xf32> to vector<128xf32>
    %c20_229 = arith.constant 20 : index
    %c0_230 = arith.constant 0 : index
    %597 = vector.load %arg2[%c20_229, %c0_230] : memref<32x128xf32, #tpu.memory_space<vmem>>, vector<1x128xf32>
    %598 = vector.shape_cast %597 : vector<1x128xf32> to vector<128xf32>
    %599 = vector.extract_strided_slice %1 {offsets = [6, 0], sizes = [1, 128], strides = [1, 1]} : vector<8x128xf32> to vector<1x128xf32>
    %600 = vector.shape_cast %599 : vector<1x128xf32> to vector<128xf32>
    %601 = arith.mulf %458, %588 : vector<128xf32>
    %602 = arith.mulf %460, %590 : vector<128xf32>
    %603 = arith.addf %601, %602 : vector<128xf32>
    %604 = arith.mulf %462, %592 : vector<128xf32>
    %605 = arith.addf %603, %604 : vector<128xf32>
    %606 = arith.mulf %464, %594 : vector<128xf32>
    %607 = arith.addf %605, %606 : vector<128xf32>
    %608 = arith.mulf %466, %596 : vector<128xf32>
    %609 = arith.addf %607, %608 : vector<128xf32>
    %610 = arith.mulf %468, %598 : vector<128xf32>
    %611 = arith.addf %609, %610 : vector<128xf32>
    %612 = arith.mulf %470, %600 : vector<128xf32>
    %613 = arith.addf %611, %612 : vector<128xf32>
    %c62 = arith.constant 62 : index
    %c0_231 = arith.constant 0 : index
    %614 = vector.load %arg3[%c62, %c0_231] : memref<64x128xf32, #tpu.memory_space<vmem>>, vector<1x128xf32>
    %615 = vector.shape_cast %614 : vector<1x128xf32> to vector<128xf32>
    %616 = vector.shape_cast %613 : vector<128xf32> to vector<1x128xf32>
    tpu.vector_store %arg3[%c62, %c0_231], %616 {strides = array<i32>} : memref<64x128xf32, #tpu.memory_space<vmem>>, vector<1x128xf32>,
    %c55 = arith.constant 55 : index
    %c0_232 = arith.constant 0 : index
    %617 = vector.load %arg3[%c55, %c0_232] : memref<64x128xf32, #tpu.memory_space<vmem>>, vector<1x128xf32>
    %618 = vector.shape_cast %617 : vector<1x128xf32> to vector<128xf32>
    %619 = vector.shape_cast %613 : vector<128xf32> to vector<1x128xf32>
    tpu.vector_store %arg3[%c55, %c0_232], %619 {strides = array<i32>} : memref<64x128xf32, #tpu.memory_space<vmem>>, vector<1x128xf32>,
    %620 = arith.mulf %458, %458 : vector<128xf32>
    %621 = arith.mulf %460, %460 : vector<128xf32>
    %622 = arith.addf %620, %621 : vector<128xf32>
    %623 = arith.mulf %462, %462 : vector<128xf32>
    %624 = arith.addf %622, %623 : vector<128xf32>
    %625 = arith.mulf %464, %464 : vector<128xf32>
    %626 = arith.addf %624, %625 : vector<128xf32>
    %627 = arith.mulf %466, %466 : vector<128xf32>
    %628 = arith.addf %626, %627 : vector<128xf32>
    %629 = arith.mulf %468, %468 : vector<128xf32>
    %630 = arith.addf %628, %629 : vector<128xf32>
    %631 = arith.mulf %470, %470 : vector<128xf32>
    %632 = arith.addf %630, %631 : vector<128xf32>
    %633 = arith.mulf %472, %472 : vector<128xf32>
    %634 = arith.addf %632, %633 : vector<128xf32>
    %c63 = arith.constant 63 : index
    %c0_233 = arith.constant 0 : index
    %635 = vector.load %arg3[%c63, %c0_233] : memref<64x128xf32, #tpu.memory_space<vmem>>, vector<1x128xf32>
    %636 = vector.shape_cast %635 : vector<1x128xf32> to vector<128xf32>
    %637 = vector.shape_cast %634 : vector<128xf32> to vector<1x128xf32>
    tpu.vector_store %arg3[%c63, %c0_233], %637 {strides = array<i32>} : memref<64x128xf32, #tpu.memory_space<vmem>>, vector<1x128xf32>,
    return
  }
  func.func @transform_0(%arg0: i32) -> (i32, i32) {
    %c0_i32 = arith.constant 0 : i32
    %c0_i32_0 = arith.constant 0 : i32
    return %c0_i32, %arg0 : i32, i32
  }
  func.func @transform_1(%arg0: i32) -> (i32, i32) {
    %c0_i32 = arith.constant 0 : i32
    %c0_i32_0 = arith.constant 0 : i32
    return %c0_i32, %arg0 : i32, i32
  }
  func.func @transform_2(%arg0: i32) -> (i32, i32) {
    %c0_i32 = arith.constant 0 : i32
    %c0_i32_0 = arith.constant 0 : i32
    return %c0_i32, %arg0 : i32, i32
  }
}

</mosaic_0001>

<llo_original>
// kernel: tpu_custom_call.1
$region0: #{tpu_custom_call.1}
  #allocation0 [shape = 'u32[]', space=smem, size = 0x4, offset = 0x4, fixed_abs, tag = 'smem constant byte address 0x4 - core index']
  #allocation1 [shape = 'u32[144,128]{1,0:T(1,128)}', space=vmem, size = 0x12000, scoped, tag = 'internal scratch']
  %s0 = inlined_call_operand.hbm [shape: f32[8,128], index: 0, kind: input, shape index: {}]
  %s1 = inlined_call_operand.hbm [shape: f32[32,128], index: 1, kind: input, shape index: {}]
  %s2 = inlined_call_operand.hbm [shape: f32[64,128], index: 2, kind: output, shape index: {}]
  %s3 = sld [smem:[#allocation0]]
  $region26: #{tpu_custom_call.1} parent=0
    _
  %s5 = ssub.s32 1, %s3
  %s6 = scalar_select 0, %s5, %s3
  $region1: #{tpu_custom_call.1} parent=0
    #allocation2 [shape = 'u8[4096]{0}', space=vmem, size = 0x1000, scoped, tag = 'input window, operand 0, single buffered']
    #allocation3 [shape = 's32[1]{0}', space=sflag, size = 0x4, scoped, tag = 'scoped memory for tpu_custom_call.1']
    #allocation4 [shape = 's32[1]{0}', space=sflag, size = 0x4, scoped, tag = 'scoped memory for tpu_custom_call.1']
    #allocation5 [shape = 'u8[16384]{0}', space=vmem, size = 0x4000, scoped, tag = 'input window, operand 1, single buffered']
    #allocation6 [shape = 's32[1]{0}', space=sflag, size = 0x4, scoped, tag = 'scoped memory for tpu_custom_call.1']
    #allocation7 [shape = 'u8[32768]{0}', space=vmem, size = 0x8000, scoped, tag = 'output window, operand 0, single buffered']
    %7 = vsyncpa [#allocation3], 0
    %8 = vsyncpa [#allocation6], 0
    %9 = vsyncpa [#allocation4], 0
    // Predicated region
    $region2: #{tpu_custom_call.1} parent=1 // pred_check
      _
    $region3: #{tpu_custom_call.1} parent=1 // pred_check_branch
      %11 = sbr.rel (0) target = $region5
    $region4: #{tpu_custom_call.1} parent=1 // pred_region
      %s13 = ssub.s32 128, 128
      %14 = vsyncadd [#allocation3], %s13
      %s16 = sshll.u32 [#allocation2], 4
      %s17 = int_to_ptr.vmem [resolvable:$true] %s16
      %19 = dma.hbm_to_vmem [thread:$0]  %s0, 128, %s17, [#allocation3]
    $region5: #{tpu_custom_call.1} parent=1 // pred_fallthru
      _
    // Predicated region
    $region6: #{tpu_custom_call.1} parent=1 // pred_check
      _
    $region7: #{tpu_custom_call.1} parent=1 // pred_check_branch
      %21 = sbr.rel (0) target = $region9
    $region8: #{tpu_custom_call.1} parent=1 // pred_region
      %s23 = ssub.s32 512, 512
      %24 = vsyncadd [#allocation6], %s23
      %s25 = sshll.u32 [#allocation5], 4
      %s26 = int_to_ptr.vmem [resolvable:$true] %s25
      %31 = dma.hbm_to_vmem [thread:$0]  %s1, 512, %s26, [#allocation6], 128, 128, 8
    $region9: #{tpu_custom_call.1} parent=1 // pred_fallthru
      _
    // Predicated region
    $region10: #{tpu_custom_call.1} parent=1 // pred_check
      _
    $region11: #{tpu_custom_call.1} parent=1 // pred_check_branch
      %33 = sbr.rel (0) target = $region13
    $region12: #{tpu_custom_call.1} parent=1 // pred_region
      %34 = dma.done [#allocation3], 128
    $region13: #{tpu_custom_call.1} parent=1 // pred_fallthru
      _
    // Predicated region
    $region14: #{tpu_custom_call.1} parent=1 // pred_check
      _
    $region15: #{tpu_custom_call.1} parent=1 // pred_check_branch
      %36 = sbr.rel (0) target = $region17
    $region16: #{tpu_custom_call.1} parent=1 // pred_region
      %37 = dma.done [#allocation6], 512
    $region17: #{tpu_custom_call.1} parent=1 // pred_fallthru
      _
    %v38 = vld [vmem:[#allocation2] sm:$0xff]
    %v39 = vmul.f32 %v38, 1.442695
    %v40 = vpow.pop %v39
    %v41 = vmul.f32 %v40, %v40
    %42 = vst [vmem:[#allocation7] sm:$0x1] %v41
    %v43 = vld [vmem:[#allocation5] sm:$0x1]
    %v44 = vmul.f32 %v43, %v40
    %45 = vst [vmem:[#allocation7 + $0x8] sm:$0x1] %v44
    %46 = vst [vmem:[#allocation7 + $0x1] sm:$0x1] %v44
    %v47 = vmul.f32 %v43, %v43
    %v49 = vrot.slane %v41, 1
    %v51 = vadd.f32 %v47, %v49
    %52 = vst [vmem:[#allocation7 + $0x9] sm:$0x1] %v51
    %v53 = vld [vmem:[#allocation5 + $0x1] sm:$0x1]
    %v54 = vld [vmem:[#allocation5 + $0x2] sm:$0x1]
    %v55 = vmul.f32 %v53, %v40
    %56 = vst [vmem:[#allocation7 + $0x10] sm:$0x1] %v55
    %57 = vst [vmem:[#allocation7 + $0x2] sm:$0x1] %v55
    %v58 = vld [vmem:[#allocation5] sm:$0x1]
    %v59 = vmul.f32 %v53, %v58
    %v61 = vrot.slane %v40, 1
    %v63 = vmul.f32 %v54, %v61
    %v64 = vadd.f32 %v59, %v63
    %65 = vst [vmem:[#allocation7 + $0x11] sm:$0x1] %v64
    %66 = vst [vmem:[#allocation7 + $0xa] sm:$0x1] %v64
    %v67 = vmul.f32 %v53, %v53
    %v68 = vmul.f32 %v54, %v54
    %v69 = vadd.f32 %v67, %v68
    %v70 = vrot.slane %v41, 2
    %v72 = vadd.f32 %v69, %v70
    %73 = vst [vmem:[#allocation7 + $0x12] sm:$0x1] %v72
    %v74 = vld [vmem:[#allocation5 + $0x3] sm:$0x1]
    %v75 = vld [vmem:[#allocation5 + $0x4] sm:$0x1]
    %v76 = vld [vmem:[#allocation5 + $0x5] sm:$0x1]
    %v77 = vmul.f32 %v74, %v40
    %78 = vst [vmem:[#allocation7 + $0x18] sm:$0x1] %v77
    %79 = vst [vmem:[#allocation7 + $0x3] sm:$0x1] %v77
    %v80 = vld [vmem:[#allocation5] sm:$0x1]
    %v81 = vmul.f32 %v74, %v80
    %v82 = vmul.f32 %v75, %v61
    %v83 = vadd.f32 %v81, %v82
    %84 = vst [vmem:[#allocation7 + $0x19] sm:$0x1] %v83
    %85 = vst [vmem:[#allocation7 + $0xb] sm:$0x1] %v83
    %v86 = vld [vmem:[#allocation5 + $0x1] sm:$0x1]
    %v87 = vld [vmem:[#allocation5 + $0x2] sm:$0x1]
    %v88 = vmul.f32 %v74, %v86
    %v89 = vmul.f32 %v75, %v87
    %v90 = vadd.f32 %v88, %v89
    %v91 = vrot.slane %v40, 2
    %v93 = vmul.f32 %v76, %v91
    %v94 = vadd.f32 %v90, %v93
    %95 = vst [vmem:[#allocation7 + $0x1a] sm:$0x1] %v94
    %96 = vst [vmem:[#allocation7 + $0x13] sm:$0x1] %v94
    %v97 = vmul.f32 %v74, %v74
    %v98 = vmul.f32 %v75, %v75
    %v99 = vadd.f32 %v97, %v98
    %v100 = vmul.f32 %v76, %v76
    %v101 = vadd.f32 %v99, %v100
    %v102 = vrot.slane %v41, 3
    %v104 = vadd.f32 %v101, %v102
    %105 = vst [vmem:[#allocation7 + $0x1b] sm:$0x1] %v104
    %v106 = vld [vmem:[#allocation5 + $0x6] sm:$0x1]
    %v107 = vld [vmem:[#allocation5 + $0x7] sm:$0x1]
    %v108 = vld [vmem:[#allocation5 + $0x8] sm:$0x1]
    %v109 = vld [vmem:[#allocation5 + $0x9] sm:$0x1]
    %v110 = vmul.f32 %v106, %v40
    %111 = vst [vmem:[#allocation7 + $0x20] sm:$0x1] %v110
    %112 = vst [vmem:[#allocation7 + $0x4] sm:$0x1] %v110
    %v113 = vld [vmem:[#allocation5] sm:$0x1]
    %v114 = vmul.f32 %v106, %v113
    %v115 = vmul.f32 %v107, %v61
    %v116 = vadd.f32 %v114, %v115
    %117 = vst [vmem:[#allocation7 + $0x21] sm:$0x1] %v116
    %118 = vst [vmem:[#allocation7 + $0xc] sm:$0x1] %v116
    %v119 = vld [vmem:[#allocation5 + $0x1] sm:$0x1]
    %v120 = vld [vmem:[#allocation5 + $0x2] sm:$0x1]
    %v121 = vmul.f32 %v106, %v119
    %v122 = vmul.f32 %v107, %v120
    %v123 = vadd.f32 %v121, %v122
    %v124 = vmul.f32 %v108, %v91
    %v125 = vadd.f32 %v123, %v124
    %126 = vst [vmem:[#allocation7 + $0x22] sm:$0x1] %v125
    %127 = vst [vmem:[#allocation7 + $0x14] sm:$0x1] %v125
    %v128 = vld [vmem:[#allocation5 + $0x3] sm:$0x1]
    %v129 = vld [vmem:[#allocation5 + $0x4] sm:$0x1]
    %v130 = vld [vmem:[#allocation5 + $0x5] sm:$0x1]
    %v131 = vmul.f32 %v106, %v128
    %v132 = vmul.f32 %v107, %v129
    %v133 = vadd.f32 %v131, %v132
    %v134 = vmul.f32 %v108, %v130
    %v135 = vadd.f32 %v133, %v134
    %v136 = vrot.slane %v40, 3
    %v138 = vmul.f32 %v109, %v136
    %v139 = vadd.f32 %v135, %v138
    %140 = vst [vmem:[#allocation7 + $0x23] sm:$0x1] %v139
    %141 = vst [vmem:[#allocation7 + $0x1c] sm:$0x1] %v139
    %v142 = vmul.f32 %v106, %v106
    %v143 = vmul.f32 %v107, %v107
    %v144 = vadd.f32 %v142, %v143
    %v145 = vmul.f32 %v108, %v108
    %v146 = vadd.f32 %v144, %v145
    %v147 = vmul.f32 %v109, %v109
    %v148 = vadd.f32 %v146, %v147
    %v149 = vrot.slane %v41, 4
    %v151 = vadd.f32 %v148, %v149
    %152 = vst [vmem:[#allocation7 + $0x24] sm:$0x1] %v151
    %v153 = vld [vmem:[#allocation5 + $0xa] sm:$0x1]
    %v154 = vld [vmem:[#allocation5 + $0xb] sm:$0x1]
    %v155 = vld [vmem:[#allocation5 + $0xc] sm:$0x1]
    %v156 = vld [vmem:[#allocation5 + $0xd] sm:$0x1]
    %v157 = vld [vmem:[#allocation5 + $0xe] sm:$0x1]
    %v158 = vmul.f32 %v153, %v40
    %159 = vst [vmem:[#allocation7 + $0x28] sm:$0x1] %v158
    %160 = vst [vmem:[#allocation7 + $0x5] sm:$0x1] %v158
    %v161 = vld [vmem:[#allocation5] sm:$0x1]
    %v162 = vmul.f32 %v153, %v161
    %v163 = vmul.f32 %v154, %v61
    %v164 = vadd.f32 %v162, %v163
    %165 = vst [vmem:[#allocation7 + $0x29] sm:$0x1] %v164
    %166 = vst [vmem:[#allocation7 + $0xd] sm:$0x1] %v164
    %v167 = vld [vmem:[#allocation5 + $0x1] sm:$0x1]
    %v168 = vld [vmem:[#allocation5 + $0x2] sm:$0x1]
    %v169 = vmul.f32 %v153, %v167
    %v170 = vmul.f32 %v154, %v168
    %v171 = vadd.f32 %v169, %v170
    %v172 = vmul.f32 %v155, %v91
    %v173 = vadd.f32 %v171, %v172
    %174 = vst [vmem:[#allocation7 + $0x2a] sm:$0x1] %v173
    %175 = vst [vmem:[#allocation7 + $0x15] sm:$0x1] %v173
    %v176 = vld [vmem:[#allocation5 + $0x3] sm:$0x1]
    %v177 = vld [vmem:[#allocation5 + $0x4] sm:$0x1]
    %v178 = vld [vmem:[#allocation5 + $0x5] sm:$0x1]
    %v179 = vmul.f32 %v153, %v176
    %v180 = vmul.f32 %v154, %v177
    %v181 = vadd.f32 %v179, %v180
    %v182 = vmul.f32 %v155, %v178
    %v183 = vadd.f32 %v181, %v182
    %v184 = vmul.f32 %v156, %v136
    %v185 = vadd.f32 %v183, %v184
    %186 = vst [vmem:[#allocation7 + $0x2b] sm:$0x1] %v185
    %187 = vst [vmem:[#allocation7 + $0x1d] sm:$0x1] %v185
    %v188 = vld [vmem:[#allocation5 + $0x6] sm:$0x1]
    %v189 = vld [vmem:[#allocation5 + $0x7] sm:$0x1]
    %v190 = vld [vmem:[#allocation5 + $0x8] sm:$0x1]
    %v191 = vld [vmem:[#allocation5 + $0x9] sm:$0x1]
    %v192 = vmul.f32 %v153, %v188
    %v193 = vmul.f32 %v154, %v189
    %v194 = vadd.f32 %v192, %v193
    %v195 = vmul.f32 %v155, %v190
    %v196 = vadd.f32 %v194, %v195
    %v197 = vmul.f32 %v156, %v191
    %v198 = vadd.f32 %v196, %v197
    %v199 = vrot.slane %v40, 4
    %v201 = vmul.f32 %v157, %v199
    %v202 = vadd.f32 %v198, %v201
    %203 = vst [vmem:[#allocation7 + $0x2c] sm:$0x1] %v202
    %204 = vst [vmem:[#allocation7 + $0x25] sm:$0x1] %v202
    %v205 = vmul.f32 %v153, %v153
    %v206 = vmul.f32 %v154, %v154
    %v207 = vadd.f32 %v205, %v206
    %v208 = vmul.f32 %v155, %v155
    %v209 = vadd.f32 %v207, %v208
    %v210 = vmul.f32 %v156, %v156
    %v211 = vadd.f32 %v209, %v210
    %v212 = vmul.f32 %v157, %v157
    %v213 = vadd.f32 %v211, %v212
    %v214 = vrot.slane %v41, 5
    %v216 = vadd.f32 %v213, %v214
    %217 = vst [vmem:[#allocation7 + $0x2d] sm:$0x1] %v216
    %v218 = vld [vmem:[#allocation5 + $0xf] sm:$0x1]
    %v219 = vld [vmem:[#allocation5 + $0x10] sm:$0x1]
    %v220 = vld [vmem:[#allocation5 + $0x11] sm:$0x1]
    %v221 = vld [vmem:[#allocation5 + $0x12] sm:$0x1]
    %v222 = vld [vmem:[#allocation5 + $0x13] sm:$0x1]
    %v223 = vld [vmem:[#allocation5 + $0x14] sm:$0x1]
    %v224 = vmul.f32 %v218, %v40
    %225 = vst [vmem:[#allocation7 + $0x30] sm:$0x1] %v224
    %226 = vst [vmem:[#allocation7 + $0x6] sm:$0x1] %v224
    %v227 = vld [vmem:[#allocation5] sm:$0x1]
    %v228 = vmul.f32 %v218, %v227
    %v229 = vmul.f32 %v219, %v61
    %v230 = vadd.f32 %v228, %v229
    %231 = vst [vmem:[#allocation7 + $0x31] sm:$0x1] %v230
    %232 = vst [vmem:[#allocation7 + $0xe] sm:$0x1] %v230
    %v233 = vld [vmem:[#allocation5 + $0x1] sm:$0x1]
    %v234 = vld [vmem:[#allocation5 + $0x2] sm:$0x1]
    %v235 = vmul.f32 %v218, %v233
    %v236 = vmul.f32 %v219, %v234
    %v237 = vadd.f32 %v235, %v236
    %v238 = vmul.f32 %v220, %v91
    %v239 = vadd.f32 %v237, %v238
    %240 = vst [vmem:[#allocation7 + $0x32] sm:$0x1] %v239
    %241 = vst [vmem:[#allocation7 + $0x16] sm:$0x1] %v239
    %v242 = vld [vmem:[#allocation5 + $0x3] sm:$0x1]
    %v243 = vld [vmem:[#allocation5 + $0x4] sm:$0x1]
    %v244 = vld [vmem:[#allocation5 + $0x5] sm:$0x1]
    %v245 = vmul.f32 %v218, %v242
    %v246 = vmul.f32 %v219, %v243
    %v247 = vadd.f32 %v245, %v246
    %v248 = vmul.f32 %v220, %v244
    %v249 = vadd.f32 %v247, %v248
    %v250 = vmul.f32 %v221, %v136
    %v251 = vadd.f32 %v249, %v250
    %252 = vst [vmem:[#allocation7 + $0x33] sm:$0x1] %v251
    %253 = vst [vmem:[#allocation7 + $0x1e] sm:$0x1] %v251
    %v254 = vld [vmem:[#allocation5 + $0x6] sm:$0x1]
    %v255 = vld [vmem:[#allocation5 + $0x7] sm:$0x1]
    %v256 = vld [vmem:[#allocation5 + $0x8] sm:$0x1]
    %v257 = vld [vmem:[#allocation5 + $0x9] sm:$0x1]
    %v258 = vmul.f32 %v218, %v254
    %v259 = vmul.f32 %v219, %v255
    %v260 = vadd.f32 %v258, %v259
    %v261 = vmul.f32 %v220, %v256
    %v262 = vadd.f32 %v260, %v261
    %v263 = vmul.f32 %v221, %v257
    %v264 = vadd.f32 %v262, %v263
    %v265 = vmul.f32 %v222, %v199
    %v266 = vadd.f32 %v264, %v265
    %267 = vst [vmem:[#allocation7 + $0x34] sm:$0x1] %v266
    %268 = vst [vmem:[#allocation7 + $0x26] sm:$0x1] %v266
    %v269 = vld [vmem:[#allocation5 + $0xa] sm:$0x1]
    %v270 = vld [vmem:[#allocation5 + $0xb] sm:$0x1]
    %v271 = vld [vmem:[#allocation5 + $0xc] sm:$0x1]
    %v272 = vld [vmem:[#allocation5 + $0xd] sm:$0x1]
    %v273 = vld [vmem:[#allocation5 + $0xe] sm:$0x1]
    %v274 = vmul.f32 %v218, %v269
    %v275 = vmul.f32 %v219, %v270
    %v276 = vadd.f32 %v274, %v275
    %v277 = vmul.f32 %v220, %v271
    %v278 = vadd.f32 %v276, %v277
    %v279 = vmul.f32 %v221, %v272
    %v280 = vadd.f32 %v278, %v279
    %v281 = vmul.f32 %v222, %v273
    %v282 = vadd.f32 %v280, %v281
    %v283 = vrot.slane %v40, 5
    %v285 = vmul.f32 %v223, %v283
    %v286 = vadd.f32 %v282, %v285
    %287 = vst [vmem:[#allocation7 + $0x35] sm:$0x1] %v286
    %288 = vst [vmem:[#allocation7 + $0x2e] sm:$0x1] %v286
    %v289 = vmul.f32 %v218, %v218
    %v290 = vmul.f32 %v219, %v219
    %v291 = vadd.f32 %v289, %v290
    %v292 = vmul.f32 %v220, %v220
    %v293 = vadd.f32 %v291, %v292
    %v294 = vmul.f32 %v221, %v221
    %v295 = vadd.f32 %v293, %v294
    %v296 = vmul.f32 %v222, %v222
    %v297 = vadd.f32 %v295, %v296
    %v298 = vmul.f32 %v223, %v223
    %v299 = vadd.f32 %v297, %v298
    %v300 = vrot.slane %v41, 6
    %v302 = vadd.f32 %v299, %v300
    %303 = vst [vmem:[#allocation7 + $0x36] sm:$0x1] %v302
    %v304 = vld [vmem:[#allocation5 + $0x15] sm:$0x1]
    %v305 = vld [vmem:[#allocation5 + $0x16] sm:$0x1]
    %v306 = vld [vmem:[#allocation5 + $0x17] sm:$0x1]
    %v307 = vld [vmem:[#allocation5 + $0x18] sm:$0x1]
    %v308 = vld [vmem:[#allocation5 + $0x19] sm:$0x1]
    %v309 = vld [vmem:[#allocation5 + $0x1a] sm:$0x1]
    %v310 = vld [vmem:[#allocation5 + $0x1b] sm:$0x1]
    %v311 = vmul.f32 %v304, %v40
    %312 = vst [vmem:[#allocation7 + $0x38] sm:$0x1] %v311
    %313 = vst [vmem:[#allocation7 + $0x7] sm:$0x1] %v311
    %v314 = vld [vmem:[#allocation5] sm:$0x1]
    %v315 = vmul.f32 %v304, %v314
    %v316 = vmul.f32 %v305, %v61
    %v317 = vadd.f32 %v315, %v316
    %318 = vst [vmem:[#allocation7 + $0x39] sm:$0x1] %v317
    %319 = vst [vmem:[#allocation7 + $0xf] sm:$0x1] %v317
    %v320 = vld [vmem:[#allocation5 + $0x1] sm:$0x1]
    %v321 = vld [vmem:[#allocation5 + $0x2] sm:$0x1]
    %v322 = vmul.f32 %v304, %v320
    %v323 = vmul.f32 %v305, %v321
    %v324 = vadd.f32 %v322, %v323
    %v325 = vmul.f32 %v306, %v91
    %v326 = vadd.f32 %v324, %v325
    %327 = vst [vmem:[#allocation7 + $0x3a] sm:$0x1] %v326
    %328 = vst [vmem:[#allocation7 + $0x17] sm:$0x1] %v326
    %v329 = vld [vmem:[#allocation5 + $0x3] sm:$0x1]
    %v330 = vld [vmem:[#allocation5 + $0x4] sm:$0x1]
    %v331 = vld [vmem:[#allocation5 + $0x5] sm:$0x1]
    %v332 = vmul.f32 %v304, %v329
    %v333 = vmul.f32 %v305, %v330
    %v334 = vadd.f32 %v332, %v333
    %v335 = vmul.f32 %v306, %v331
    %v336 = vadd.f32 %v334, %v335
    %v337 = vmul.f32 %v307, %v136
    %v338 = vadd.f32 %v336, %v337
    %339 = vst [vmem:[#allocation7 + $0x3b] sm:$0x1] %v338
    %340 = vst [vmem:[#allocation7 + $0x1f] sm:$0x1] %v338
    %v341 = vld [vmem:[#allocation5 + $0x6] sm:$0x1]
    %v342 = vld [vmem:[#allocation5 + $0x7] sm:$0x1]
    %v343 = vld [vmem:[#allocation5 + $0x8] sm:$0x1]
    %v344 = vld [vmem:[#allocation5 + $0x9] sm:$0x1]
    %v345 = vmul.f32 %v304, %v341
    %v346 = vmul.f32 %v305, %v342
    %v347 = vadd.f32 %v345, %v346
    %v348 = vmul.f32 %v306, %v343
    %v349 = vadd.f32 %v347, %v348
    %v350 = vmul.f32 %v307, %v344
    %v351 = vadd.f32 %v349, %v350
    %v352 = vmul.f32 %v308, %v199
    %v353 = vadd.f32 %v351, %v352
    %354 = vst [vmem:[#allocation7 + $0x3c] sm:$0x1] %v353
    %355 = vst [vmem:[#allocation7 + $0x27] sm:$0x1] %v353
    %v356 = vld [vmem:[#allocation5 + $0xa] sm:$0x1]
    %v357 = vld [vmem:[#allocation5 + $0xb] sm:$0x1]
    %v358 = vld [vmem:[#allocation5 + $0xc] sm:$0x1]
    %v359 = vld [vmem:[#allocation5 + $0xd] sm:$0x1]
    %v360 = vld [vmem:[#allocation5 + $0xe] sm:$0x1]
    %v361 = vmul.f32 %v304, %v356
    %v362 = vmul.f32 %v305, %v357
    %v363 = vadd.f32 %v361, %v362
    %v364 = vmul.f32 %v306, %v358
    %v365 = vadd.f32 %v363, %v364
    %v366 = vmul.f32 %v307, %v359
    %v367 = vadd.f32 %v365, %v366
    %v368 = vmul.f32 %v308, %v360
    %v369 = vadd.f32 %v367, %v368
    %v370 = vmul.f32 %v309, %v283
    %v371 = vadd.f32 %v369, %v370
    %372 = vst [vmem:[#allocation7 + $0x3d] sm:$0x1] %v371
    %373 = vst [vmem:[#allocation7 + $0x2f] sm:$0x1] %v371
    %v374 = vld [vmem:[#allocation5 + $0xf] sm:$0x1]
    %v375 = vld [vmem:[#allocation5 + $0x10] sm:$0x1]
    %v376 = vld [vmem:[#allocation5 + $0x11] sm:$0x1]
    %v377 = vld [vmem:[#allocation5 + $0x12] sm:$0x1]
    %v378 = vld [vmem:[#allocation5 + $0x13] sm:$0x1]
    %v379 = vld [vmem:[#allocation5 + $0x14] sm:$0x1]
    %v380 = vmul.f32 %v304, %v374
    %v381 = vmul.f32 %v305, %v375
    %v382 = vadd.f32 %v380, %v381
    %v383 = vmul.f32 %v306, %v376
    %v384 = vadd.f32 %v382, %v383
    %v385 = vmul.f32 %v307, %v377
    %v386 = vadd.f32 %v384, %v385
    %v387 = vmul.f32 %v308, %v378
    %v388 = vadd.f32 %v386, %v387
    %v389 = vmul.f32 %v309, %v379
    %v390 = vadd.f32 %v388, %v389
    %v391 = vrot.slane %v40, 6
    %v393 = vmul.f32 %v310, %v391
    %v394 = vadd.f32 %v390, %v393
    %395 = vst [vmem:[#allocation7 + $0x3e] sm:$0x1] %v394
    %396 = vst [vmem:[#allocation7 + $0x37] sm:$0x1] %v394
    %v397 = vmul.f32 %v304, %v304
    %v398 = vmul.f32 %v305, %v305
    %v399 = vadd.f32 %v397, %v398
    %v400 = vmul.f32 %v306, %v306
    %v401 = vadd.f32 %v399, %v400
    %v402 = vmul.f32 %v307, %v307
    %v403 = vadd.f32 %v401, %v402
    %v404 = vmul.f32 %v308, %v308
    %v405 = vadd.f32 %v403, %v404
    %v406 = vmul.f32 %v309, %v309
    %v407 = vadd.f32 %v405, %v406
    %v408 = vmul.f32 %v310, %v310
    %v409 = vadd.f32 %v407, %v408
    %v410 = vrot.slane %v41, 7
    %v412 = vadd.f32 %v409, %v410
    %413 = vst [vmem:[#allocation7 + $0x3f] sm:$0x1] %v412
    // Predicated region
    $region18: #{tpu_custom_call.1} parent=1 // pred_check
      _
    $region19: #{tpu_custom_call.1} parent=1 // pred_check_branch
      %415 = sbr.rel (0) target = $region21
    $region20: #{tpu_custom_call.1} parent=1 // pred_region
      %s417 = ssub.s32 1024, 1024
      %418 = vsyncadd [#allocation4], %s417
      %s419 = sshll.u32 [#allocation7], 4
      %s420 = int_to_ptr.vmem [resolvable:$true] %s419
      %425 = dma.vmem_to_hbm [thread:$0]  %s420, 1024, %s2, [#allocation4], 128, 128, 8
    $region21: #{tpu_custom_call.1} parent=1 // pred_fallthru
      _
    // Predicated region
    $region22: #{tpu_custom_call.1} parent=1 // pred_check
      _
    $region23: #{tpu_custom_call.1} parent=1 // pred_check_branch
      %427 = sbr.rel (0) target = $region25
    $region24: #{tpu_custom_call.1} parent=1 // pred_region
      %428 = dma.done [#allocation4], 1024
    $region25: #{tpu_custom_call.1} parent=1 // pred_fallthru
      _
    %429 = vsyncpa [#allocation3], 1
    %430 = vsyncpa [#allocation6], 1
    %431 = vsyncpa [#allocation4], 1

</llo_original>
